<compile_context>
chip_gen: v6e
topology: v6e:2x2x1
jax: 0.10.0
libtpu: 0.0.40
codegen_flags: <defaults>
</compile_context>

<pallas_src>
import functools
import math

import jax
import jax.numpy as jnp
from jax.experimental import pallas as pl
from jax.experimental.pallas import tpu as pltpu


# ---------------------------------------------------------------------------
# Kernel
# ---------------------------------------------------------------------------
def _cycle_flash_kernel(q_ref, k_ref, v_ref, w_ref, b_ref, o_ref,
                        qp_sc, m_sc, l_sc, acc_sc, *, mxu_dtype):
    """One grid step: a block of Cb cycles x one KV block of Tk rows.

    q_ref:  (Cb, S,  E)    activations (resident across the kv axis)
    k_ref:  (Cb, Tk, E)
    v_ref:  (Cb, Tk, E)
    w_ref:  (Cb, 3, E, E)  packed [Wq*E^-0.5, Wk, Wv], pre-cast to mxu_dtype
    b_ref:  (Cb, 3, 1, E)  packed [bq*E^-0.5, bk, bv], f32
    o_ref:  (Cb, S,  E)    written on the last kv step
    scratch: qp_sc (Cb,S,E) mxu_dtype; m_sc/l_sc (Cb,S,1) f32; acc_sc (Cb,S,E) f32
    """
    kv = pl.program_id(1)
    nk = pl.num_programs(1)

    def proj(x, idx):
        w = w_ref[:, idx]                                   # (Cb, E, E)
        if w.dtype != mxu_dtype:                            # no-op when pre-cast
            w = w.astype(mxu_dtype)
        b = b_ref[:, idx]                                   # (Cb, 1, E) f32
        # Batched (over cycles) x @ W with f32 accumulation on the MXU.
        y = jax.lax.dot_general(
            x.astype(mxu_dtype), w,
            dimension_numbers=(((2,), (1,)), ((0,), (0,))),
            preferred_element_type=jnp.float32)
        return jnp.maximum(y + b, 0.0)                      # bias + ReLU in f32

    @pl.when(kv == 0)
    def _():
        # q projection (scale pre-folded into Wq/bq) done once per cycle block;
        # result stays resident in VMEM scratch across all kv steps.
        qp_sc[...] = proj(q_ref[...], 0).astype(mxu_dtype)
        m_sc[...] = jnp.full_like(m_sc, -jnp.inf)
        l_sc[...] = jnp.zeros_like(l_sc)
        acc_sc[...] = jnp.zeros_like(acc_sc)

    kp = proj(k_ref[...], 1)                                # (Cb, Tk, E) f32
    vp = proj(v_ref[...], 2)                                # (Cb, Tk, E) f32

    # Scores for this KV block: batched NT contraction (no explicit transpose).
    s = jax.lax.dot_general(
        qp_sc[...], kp.astype(mxu_dtype),
        dimension_numbers=(((2,), (2,)), ((0,), (0,))),
        preferred_element_type=jnp.float32)                 # (Cb, S, Tk) f32

    # Online (flash) softmax update; only (Cb, S, Tk)-sized temporaries live.
    m_prev = m_sc[...]
    m_new = jnp.maximum(m_prev, jnp.max(s, axis=-1, keepdims=True))
    alpha = jnp.exp(m_prev - m_new)                         # (Cb, S, 1)
    p = jnp.exp(s - m_new)                                  # single f32 S*Tk temp
    l_sc[...] = alpha * l_sc[...] + jnp.sum(p, axis=-1, keepdims=True)
    acc_sc[...] = alpha * acc_sc[...] + jax.lax.dot_general(
        p.astype(mxu_dtype), vp.astype(mxu_dtype),
        dimension_numbers=(((2,), (1,)), ((0,), (0,))),
        preferred_element_type=jnp.float32)                 # (Cb, S, E) f32
    m_sc[...] = m_new

    @pl.when(kv == nk - 1)
    def _():
        # Exact normalization: the (Cb, S, 1) divide is negligible next to the
        # S*Tk work and keeps softmax rows summing to 1.
        o_ref[...] = (acc_sc[...] / l_sc[...]).astype(o_ref.dtype)


# ---------------------------------------------------------------------------
# Generation-aware sizing helpers
# ---------------------------------------------------------------------------
def _vmem_budget_bytes():
    """~70% of physical VMEM, capped at 96 MiB.

    v5e/v6e (128 MiB physical) -> ~90 MiB; v7x (64 MiB per TC) -> ~45 MiB.
    """
    cap = 128 * 1024 * 1024
    try:
        info = pltpu.get_tpu_info()
        cap = int(getattr(info, "vmem_capacity_bytes", cap)) or cap
    except Exception:
        pass
    return min(cap * 7 // 10, 96 * 1024 * 1024)


def _default_kv_block(S):
    for t in (1024, 512, 256, 128):
        if t <= S and S % t == 0:
            return t
    return S


def _default_cycles_per_block(C, S, E, Tk, in_bytes, out_bytes, mxu_bytes,
                              vmem_budget):
    # Rough per-cycle VMEM footprint: double-buffered pipeline blocks + scratch
    # + the largest in-kernel temporaries.
    per_cycle = (
        2 * S * E * in_bytes                 # q block (double-buffered)
        + 2 * 2 * Tk * E * in_bytes          # k, v blocks
        + 2 * 3 * E * E * mxu_bytes          # packed weights (pre-cast)
        + 2 * 3 * E * 4                      # packed biases (f32)
        + 2 * S * E * out_bytes              # output block
        + S * E * (mxu_bytes + 4)            # qp scratch + f32 accumulator
        + 2 * S * 4                          # m, l scratch
        + S * Tk * (4 + 4 + mxu_bytes)       # scores, p (f32), p (mxu) temps
        + 2 * Tk * E * (4 + mxu_bytes)       # kp, vp (f32 + mxu copies)
    )
    cb_budget = max(1, int(vmem_budget * 0.6) // per_cycle)
    fitting = [d for d in range(1, C + 1) if C % d == 0 and d <= cb_budget]
    if not fitting:
        return 1
    cb = max(fitting)

    total_bytes = C * (3 * S * E * in_bytes + S * E * out_bytes
                       + 3 * E * E * mxu_bytes)
    if cb == C and total_bytes < (4 << 20):
        return cb          # toy scale: per-step overhead dominates, 1 grid step

    # Otherwise prefer an even cycle-grid with >= 4 steps (pipeline steady
    # state; >= 2 steps per v7x TensorCore), as large as still fits.
    for d in sorted(fitting, reverse=True):
        steps = C // d
        if steps >= 4 and steps % 2 == 0:
            return d
    return cb


# ---------------------------------------------------------------------------
# Parameter packing (one-time, hoisted out of the per-call path)
# ---------------------------------------------------------------------------
def pack_cycle_attention_params(wq, wk, wv, bq, bk, bv, *,
                                mxu_dtype=jnp.bfloat16):
    """Fold the E^-0.5 query scale into Wq/bq (valid: ReLU is positively
    homogeneous), pack cycle-major so each grid step's weight DMA is one
    contiguous slab, and pre-cast weights to the MXU dtype.  Call once at
    weight-load time, NOT per forward pass."""
    E = wq.shape[-1]
    scale = float(E) ** (-0.5)
    w_packed = jnp.stack([wq * scale, wk, wv], axis=1).astype(mxu_dtype)   # (C,3,E,E)
    b_packed = jnp.stack([bq * scale, bk, bv], axis=1).astype(jnp.float32) # (C,3,1,E)
    return w_packed, b_packed


# ---------------------------------------------------------------------------
# Forward wrapper
# ---------------------------------------------------------------------------
def cycle_wise_self_attention(query, key, value, w_packed, b_packed, *,
                              cycles_per_block=None, kv_block=None,
                              mxu_dtype=jnp.bfloat16, vmem_limit_bytes=None):
    """query/key/value: (C, S, E); w_packed: (C, 3, E, E); b_packed: (C, 3, 1, E)."""
    C, S, E = query.shape
    assert w_packed.shape == (C, 3, E, E)
    assert b_packed.shape == (C, 3, 1, E)

    if vmem_limit_bytes is None:
        vmem_limit_bytes = _vmem_budget_bytes()
    if kv_block is None:
        kv_block = _default_kv_block(S)
    assert S % kv_block == 0, "kv_block must divide seq length"

    in_bytes = query.dtype.itemsize
    out_bytes = query.dtype.itemsize
    mxu_bytes = jnp.dtype(mxu_dtype).itemsize
    if cycles_per_block is None:
        cycles_per_block = _default_cycles_per_block(
            C, S, E, kv_block, in_bytes, out_bytes, mxu_bytes,
            vmem_limit_bytes)
    assert C % cycles_per_block == 0, "num_cycles must divide evenly"

    Cb = cycles_per_block
    Tk = kv_block
    grid = (C // Cb, S // Tk)

    qo_spec = pl.BlockSpec((Cb, S, E), lambda c, kv: (c, 0, 0))
    kv_spec = pl.BlockSpec((Cb, Tk, E), lambda c, kv: (c, kv, 0))
    w_spec = pl.BlockSpec((Cb, 3, E, E), lambda c, kv: (c, 0, 0, 0))
    b_spec = pl.BlockSpec((Cb, 3, 1, E), lambda c, kv: (c, 0, 0, 0))

    kernel = functools.partial(_cycle_flash_kernel, mxu_dtype=mxu_dtype)

    return pl.pallas_call(
        kernel,
        out_shape=jax.ShapeDtypeStruct((C, S, E), query.dtype),
        grid_spec=pltpu.PrefetchScalarGridSpec(
            num_scalar_prefetch=0,
            grid=grid,
            in_specs=[qo_spec, kv_spec, kv_spec, w_spec, b_spec],
            out_specs=qo_spec,
            scratch_shapes=[
                pltpu.VMEM((Cb, S, E), mxu_dtype),     # projected q
                pltpu.VMEM((Cb, S, 1), jnp.float32),   # running max m
                pltpu.VMEM((Cb, S, 1), jnp.float32),   # running sum l
                pltpu.VMEM((Cb, S, E), jnp.float32),   # f32 output accumulator
            ]),
        compiler_params=pltpu.CompilerParams(
            dimension_semantics=("parallel", "arbitrary"),
            vmem_limit_bytes=int(vmem_limit_bytes),
        ),
    )(query, key, value, w_packed, b_packed)


# ---------------------------------------------------------------------------
# Reference + test
# ---------------------------------------------------------------------------
def _xavier_normal(rng_key, shape):
    # torch xavier_normal_ on (C, E_in, E_out): fan_in/fan_out are last two dims.
    fan_in, fan_out = shape[-2], shape[-1]
    std = math.sqrt(2.0 / (fan_in + fan_out))
    return jax.random.normal(rng_key, shape, dtype=jnp.float32) * std


def reference_forward(query, key, value, wq, wk, wv, bq, bk, bv):
    E = query.shape[-1]
    q = jax.nn.relu(jnp.einsum('cse,cef->csf', query, wq) + bq)
    k = jax.nn.relu(jnp.einsum('cse,cef->csf', key, wk) + bk)
    v = jax.nn.relu(jnp.einsum('cse,cef->csf', value, wv) + bv)
    q = q * float(E) ** (-0.5)
    w = jax.nn.softmax(jnp.einsum('cqe,cke->cqk', q, k), axis=-1)
    return jnp.einsum('cqk,cke->cqe', w, v)


if __name__ == "__main__":
    num_cycles, seq, embed_dim = 4, 8, 32

    root = jax.random.PRNGKey(0)
    k_q, k_k, k_v, k_wq, k_wk, k_wv = jax.random.split(root, 6)

    query = jax.random.normal(k_q, (num_cycles, seq, embed_dim), jnp.float32)
    key = jax.random.normal(k_k, (num_cycles, seq, embed_dim), jnp.float32)
    value = jax.random.normal(k_v, (num_cycles, seq, embed_dim), jnp.float32)

    wq = _xavier_normal(k_wq, (num_cycles, embed_dim, embed_dim))
    wk = _xavier_normal(k_wk, (num_cycles, embed_dim, embed_dim))
    wv = _xavier_normal(k_wv, (num_cycles, embed_dim, embed_dim))
    bq = jnp.zeros((num_cycles, 1, embed_dim), jnp.float32)
    bk = jnp.zeros((num_cycles, 1, embed_dim), jnp.float32)
    bv = jnp.zeros((num_cycles, 1, embed_dim), jnp.float32)

    # One-time parameter packing (in a real model this happens at init /
    # weight-load time, not per forward call).
    w_packed, b_packed = pack_cycle_attention_params(wq, wk, wv, bq, bk, bv)
    w_packed = jax.block_until_ready(w_packed)
    b_packed = jax.block_until_ready(b_packed)

    out = cycle_wise_self_attention(query, key, value, w_packed, b_packed)
    out = jax.block_until_ready(out)

    assert out.shape == query.shape

    ref = reference_forward(query, key, value, wq, wk, wv, bq, bk, bv)
    # Tolerance loosened vs the f32 reference: the kernel feeds the MXU bf16
    # operands (f32 accumulation).  Softmax normalization itself is exact.
    assert jnp.allclose(out, ref, atol=5e-2, rtol=5e-2), "mismatch vs reference"

    print("KERNEL_OK")
</pallas_src>

<mosaic_0001>
module attributes {stable_mosaic.version = 11 : i64} {
  func.func @_cycle_flash_kernel(%arg0: i32, %arg1: i32, %arg2: memref<4x8x32xf32, #tpu.memory_space<vmem>>, %arg3: memref<4x8x32xf32, #tpu.memory_space<vmem>>, %arg4: memref<4x8x32xf32, #tpu.memory_space<vmem>>, %arg5: memref<4x3x32x32xbf16, #tpu.memory_space<vmem>>, %arg6: memref<4x3x1x32xf32, #tpu.memory_space<vmem>>, %arg7: memref<4x8x32xf32, #tpu.memory_space<vmem>>, %arg8: memref<4x8x32xbf16, #tpu.memory_space<vmem>>, %arg9: memref<4x8x1xf32, #tpu.memory_space<vmem>>, %arg10: memref<4x8x1xf32, #tpu.memory_space<vmem>>, %arg11: memref<4x8x32xf32, #tpu.memory_space<vmem>>) attributes {dimension_semantics = [#tpu.dimension_semantics<parallel>, #tpu.dimension_semantics<arbitrary>], iteration_bounds = array<i64: 1, 1>, scalar_prefetch = 0 : i64, scratch_operands = 4 : i64, tpu.core_type = #tpu.core_type<tc>, window_params = [{transform_indices = @transform_0, window_bounds = array<i64: 4, 8, 32>}, {transform_indices = @transform_1, window_bounds = array<i64: 4, 8, 32>}, {transform_indices = @transform_2, window_bounds = array<i64: 4, 8, 32>}, {transform_indices = @transform_3, window_bounds = array<i64: 4, 3, 32, 32>}, {transform_indices = @transform_4, window_bounds = array<i64: 4, 3, 1, 32>}, {transform_indices = @transform_5, window_bounds = array<i64: 4, 8, 32>}]} {
    %c0_i32 = arith.constant 0 : i32
    %0 = arith.cmpi eq, %arg1, %c0_i32 : i32
    %1 = arith.extui %0 : i1 to i32
    %c0_i32_0 = arith.constant 0 : i32
    %2 = arith.cmpi ne, %1, %c0_i32_0 : i32
    scf.if %2 {
      %c0_50 = arith.constant 0 : index
      %c0_51 = arith.constant 0 : index
      %c0_52 = arith.constant 0 : index
      %55 = vector.load %arg2[%c0_50, %c0_51, %c0_52] : memref<4x8x32xf32, #tpu.memory_space<vmem>>, vector<4x8x32xf32>
      %c0_53 = arith.constant 0 : index
      %c0_54 = arith.constant 0 : index
      %c0_55 = arith.constant 0 : index
      %c0_56 = arith.constant 0 : index
      %56 = vector.load %arg5[%c0_53, %c0_54, %c0_55, %c0_56] : memref<4x3x32x32xbf16, #tpu.memory_space<vmem>>, vector<4x1x32x32xbf16>
      %57 = vector.shape_cast %56 : vector<4x1x32x32xbf16> to vector<4x32x32xbf16>
      %c0_57 = arith.constant 0 : index
      %c0_58 = arith.constant 0 : index
      %c0_59 = arith.constant 0 : index
      %c0_60 = arith.constant 0 : index
      %58 = vector.load %arg6[%c0_57, %c0_58, %c0_59, %c0_60] : memref<4x3x1x32xf32, #tpu.memory_space<vmem>>, vector<4x1x1x32xf32>
      %59 = vector.shape_cast %58 : vector<4x1x1x32xf32> to vector<4x1x32xf32>
      %60 = arith.truncf %55 : vector<4x8x32xf32> to vector<4x8x32xbf16>
      %cst_61 = arith.constant dense<0.000000e+00> : vector<4x8x32xf32>
      %61 = tpu.matmul %60, %57, %cst_61 {dimension_numbers = #tpu.dot_dimension_numbers<[2], [1], [1], [2], [0, 0, 0, 1, 1, 2], [0], [0]>} : vector<4x8x32xbf16>, vector<4x32x32xbf16>, vector<4x8x32xf32> -> vector<4x8x32xf32>
      %62 = vector.broadcast %59 : vector<4x1x32xf32> to vector<4x8x32xf32>
      %63 = arith.addf %61, %62 : vector<4x8x32xf32>
      %cst_62 = arith.constant 0.000000e+00 : f32
      %64 = vector.broadcast %cst_62 : f32 to vector<4x8x32xf32>
      %65 = arith.maximumf %63, %64 : vector<4x8x32xf32>
      %66 = arith.truncf %65 : vector<4x8x32xf32> to vector<4x8x32xbf16>
      %c0_63 = arith.constant 0 : index
      %c0_64 = arith.constant 0 : index
      %c0_65 = arith.constant 0 : index
      %67 = vector.load %arg8[%c0_63, %c0_64, %c0_65] : memref<4x8x32xbf16, #tpu.memory_space<vmem>>, vector<4x8x32xbf16>
      tpu.vector_store %arg8[%c0_63, %c0_64, %c0_65], %66 {strides = array<i32>} : memref<4x8x32xbf16, #tpu.memory_space<vmem>>, vector<4x8x32xbf16>,
      %cst_66 = arith.constant 0xFF800000 : f32
      %68 = vector.broadcast %cst_66 : f32 to vector<4x8x1xf32>
      %c0_67 = arith.constant 0 : index
      %c0_68 = arith.constant 0 : index
      %c0_69 = arith.constant 0 : index
      %69 = vector.load %arg9[%c0_67, %c0_68, %c0_69] : memref<4x8x1xf32, #tpu.memory_space<vmem>>, vector<4x8x1xf32>
      tpu.vector_store %arg9[%c0_67, %c0_68, %c0_69], %68 {strides = array<i32>} : memref<4x8x1xf32, #tpu.memory_space<vmem>>, vector<4x8x1xf32>,
      %cst_70 = arith.constant 0.000000e+00 : f32
      %70 = vector.broadcast %cst_70 : f32 to vector<4x8x1xf32>
      %c0_71 = arith.constant 0 : index
      %c0_72 = arith.constant 0 : index
      %c0_73 = arith.constant 0 : index
      %71 = vector.load %arg10[%c0_71, %c0_72, %c0_73] : memref<4x8x1xf32, #tpu.memory_space<vmem>>, vector<4x8x1xf32>
      tpu.vector_store %arg10[%c0_71, %c0_72, %c0_73], %70 {strides = array<i32>} : memref<4x8x1xf32, #tpu.memory_space<vmem>>, vector<4x8x1xf32>,
      %cst_74 = arith.constant 0.000000e+00 : f32
      %72 = vector.broadcast %cst_74 : f32 to vector<4x8x32xf32>
      %c0_75 = arith.constant 0 : index
      %c0_76 = arith.constant 0 : index
      %c0_77 = arith.constant 0 : index
      %73 = vector.load %arg11[%c0_75, %c0_76, %c0_77] : memref<4x8x32xf32, #tpu.memory_space<vmem>>, vector<4x8x32xf32>
      tpu.vector_store %arg11[%c0_75, %c0_76, %c0_77], %72 {strides = array<i32>} : memref<4x8x32xf32, #tpu.memory_space<vmem>>, vector<4x8x32xf32>,
    } else {
    }
    %c0 = arith.constant 0 : index
    %c0_1 = arith.constant 0 : index
    %c0_2 = arith.constant 0 : index
    %3 = vector.load %arg3[%c0, %c0_1, %c0_2] : memref<4x8x32xf32, #tpu.memory_space<vmem>>, vector<4x8x32xf32>
    %c0_3 = arith.constant 0 : index
    %c1 = arith.constant 1 : index
    %c0_4 = arith.constant 0 : index
    %c0_5 = arith.constant 0 : index
    %4 = vector.load %arg5[%c0_3, %c1, %c0_4, %c0_5] : memref<4x3x32x32xbf16, #tpu.memory_space<vmem>>, vector<4x1x32x32xbf16>
    %5 = vector.shape_cast %4 : vector<4x1x32x32xbf16> to vector<4x32x32xbf16>
    %c0_6 = arith.constant 0 : index
    %c1_7 = arith.constant 1 : index
    %c0_8 = arith.constant 0 : index
    %c0_9 = arith.constant 0 : index
    %6 = vector.load %arg6[%c0_6, %c1_7, %c0_8, %c0_9] : memref<4x3x1x32xf32, #tpu.memory_space<vmem>>, vector<4x1x1x32xf32>
    %7 = vector.shape_cast %6 : vector<4x1x1x32xf32> to vector<4x1x32xf32>
    %8 = arith.truncf %3 : vector<4x8x32xf32> to vector<4x8x32xbf16>
    %cst = arith.constant dense<0.000000e+00> : vector<4x8x32xf32>
    %9 = tpu.matmul %8, %5, %cst {dimension_numbers = #tpu.dot_dimension_numbers<[2], [1], [1], [2], [0, 0, 0, 1, 1, 2], [0], [0]>} : vector<4x8x32xbf16>, vector<4x32x32xbf16>, vector<4x8x32xf32> -> vector<4x8x32xf32>
    %10 = vector.broadcast %7 : vector<4x1x32xf32> to vector<4x8x32xf32>
    %11 = arith.addf %9, %10 : vector<4x8x32xf32>
    %cst_10 = arith.constant 0.000000e+00 : f32
    %12 = vector.broadcast %cst_10 : f32 to vector<4x8x32xf32>
    %13 = arith.maximumf %11, %12 : vector<4x8x32xf32>
    %c0_11 = arith.constant 0 : index
    %c0_12 = arith.constant 0 : index
    %c0_13 = arith.constant 0 : index
    %14 = vector.load %arg4[%c0_11, %c0_12, %c0_13] : memref<4x8x32xf32, #tpu.memory_space<vmem>>, vector<4x8x32xf32>
    %c0_14 = arith.constant 0 : index
    %c2 = arith.constant 2 : index
    %c0_15 = arith.constant 0 : index
    %c0_16 = arith.constant 0 : index
    %15 = vector.load %arg5[%c0_14, %c2, %c0_15, %c0_16] : memref<4x3x32x32xbf16, #tpu.memory_space<vmem>>, vector<4x1x32x32xbf16>
    %16 = vector.shape_cast %15 : vector<4x1x32x32xbf16> to vector<4x32x32xbf16>
    %c0_17 = arith.constant 0 : index
    %c2_18 = arith.constant 2 : index
    %c0_19 = arith.constant 0 : index
    %c0_20 = arith.constant 0 : index
    %17 = vector.load %arg6[%c0_17, %c2_18, %c0_19, %c0_20] : memref<4x3x1x32xf32, #tpu.memory_space<vmem>>, vector<4x1x1x32xf32>
    %18 = vector.shape_cast %17 : vector<4x1x1x32xf32> to vector<4x1x32xf32>
    %19 = arith.truncf %14 : vector<4x8x32xf32> to vector<4x8x32xbf16>
    %cst_21 = arith.constant dense<0.000000e+00> : vector<4x8x32xf32>
    %20 = tpu.matmul %19, %16, %cst_21 {dimension_numbers = #tpu.dot_dimension_numbers<[2], [1], [1], [2], [0, 0, 0, 1, 1, 2], [0], [0]>} : vector<4x8x32xbf16>, vector<4x32x32xbf16>, vector<4x8x32xf32> -> vector<4x8x32xf32>
    %21 = vector.broadcast %18 : vector<4x1x32xf32> to vector<4x8x32xf32>
    %22 = arith.addf %20, %21 : vector<4x8x32xf32>
    %cst_22 = arith.constant 0.000000e+00 : f32
    %23 = vector.broadcast %cst_22 : f32 to vector<4x8x32xf32>
    %24 = arith.maximumf %22, %23 : vector<4x8x32xf32>
    %c0_23 = arith.constant 0 : index
    %c0_24 = arith.constant 0 : index
    %c0_25 = arith.constant 0 : index
    %25 = vector.load %arg8[%c0_23, %c0_24, %c0_25] : memref<4x8x32xbf16, #tpu.memory_space<vmem>>, vector<4x8x32xbf16>
    %26 = arith.truncf %13 : vector<4x8x32xf32> to vector<4x8x32xbf16>
    %cst_26 = arith.constant dense<0.000000e+00> : vector<4x8x8xf32>
    %27 = tpu.matmul %25, %26, %cst_26 {dimension_numbers = #tpu.dot_dimension_numbers<[2], [2], [1], [1], [0, 0, 0, 1, 1, 1], [0], [0]>} : vector<4x8x32xbf16>, vector<4x8x32xbf16>, vector<4x8x8xf32> -> vector<4x8x8xf32>
    %c0_27 = arith.constant 0 : index
    %c0_28 = arith.constant 0 : index
    %c0_29 = arith.constant 0 : index
    %28 = vector.load %arg9[%c0_27, %c0_28, %c0_29] : memref<4x8x1xf32, #tpu.memory_space<vmem>>, vector<4x8x1xf32>
    %cst_30 = arith.constant dense<0xFF800000> : vector<4x8xf32>
    %29 = vector.multi_reduction <maximumf>, %27, %cst_30 [2] : vector<4x8x8xf32> to vector<4x8xf32>
    %30 = vector.shape_cast %29 : vector<4x8xf32> to vector<4x8x1xf32>
    %31 = arith.maximumf %28, %30 : vector<4x8x1xf32>
    %32 = arith.subf %28, %31 : vector<4x8x1xf32>
    %33 = math.exp %32 : vector<4x8x1xf32>
    %34 = vector.broadcast %31 : vector<4x8x1xf32> to vector<4x8x8xf32>
    %35 = arith.subf %27, %34 : vector<4x8x8xf32>
    %36 = math.exp %35 : vector<4x8x8xf32>
    %c0_31 = arith.constant 0 : index
    %c0_32 = arith.constant 0 : index
    %c0_33 = arith.constant 0 : index
    %37 = vector.load %arg10[%c0_31, %c0_32, %c0_33] : memref<4x8x1xf32, #tpu.memory_space<vmem>>, vector<4x8x1xf32>
    %38 = arith.mulf %33, %37 : vector<4x8x1xf32>
    %cst_34 = arith.constant dense<0.000000e+00> : vector<4x8xf32>
    %39 = vector.multi_reduction <add>, %36, %cst_34 [2] : vector<4x8x8xf32> to vector<4x8xf32>
    %40 = vector.shape_cast %39 : vector<4x8xf32> to vector<4x8x1xf32>
    %41 = arith.addf %38, %40 : vector<4x8x1xf32>
    %c0_35 = arith.constant 0 : index
    %c0_36 = arith.constant 0 : index
    %c0_37 = arith.constant 0 : index
    %42 = vector.load %arg10[%c0_35, %c0_36, %c0_37] : memref<4x8x1xf32, #tpu.memory_space<vmem>>, vector<4x8x1xf32>
    tpu.vector_store %arg10[%c0_35, %c0_36, %c0_37], %41 {strides = array<i32>} : memref<4x8x1xf32, #tpu.memory_space<vmem>>, vector<4x8x1xf32>,
    %c0_38 = arith.constant 0 : index
    %c0_39 = arith.constant 0 : index
    %c0_40 = arith.constant 0 : index
    %43 = vector.load %arg11[%c0_38, %c0_39, %c0_40] : memref<4x8x32xf32, #tpu.memory_space<vmem>>, vector<4x8x32xf32>
    %44 = vector.broadcast %33 : vector<4x8x1xf32> to vector<4x8x32xf32>
    %45 = arith.mulf %44, %43 : vector<4x8x32xf32>
    %46 = arith.truncf %36 : vector<4x8x8xf32> to vector<4x8x8xbf16>
    %47 = arith.truncf %24 : vector<4x8x32xf32> to vector<4x8x32xbf16>
    %cst_41 = arith.constant dense<0.000000e+00> : vector<4x8x32xf32>
    %48 = tpu.matmul %46, %47, %cst_41 {dimension_numbers = #tpu.dot_dimension_numbers<[2], [1], [1], [2], [0, 0, 0, 1, 1, 2], [0], [0]>} : vector<4x8x8xbf16>, vector<4x8x32xbf16>, vector<4x8x32xf32> -> vector<4x8x32xf32>
    %49 = arith.addf %45, %48 : vector<4x8x32xf32>
    %c0_42 = arith.constant 0 : index
    %c0_43 = arith.constant 0 : index
    %c0_44 = arith.constant 0 : index
    %50 = vector.load %arg11[%c0_42, %c0_43, %c0_44] : memref<4x8x32xf32, #tpu.memory_space<vmem>>, vector<4x8x32xf32>
    tpu.vector_store %arg11[%c0_42, %c0_43, %c0_44], %49 {strides = array<i32>} : memref<4x8x32xf32, #tpu.memory_space<vmem>>, vector<4x8x32xf32>,
    %c0_45 = arith.constant 0 : index
    %c0_46 = arith.constant 0 : index
    %c0_47 = arith.constant 0 : index
    %51 = vector.load %arg9[%c0_45, %c0_46, %c0_47] : memref<4x8x1xf32, #tpu.memory_space<vmem>>, vector<4x8x1xf32>
    tpu.vector_store %arg9[%c0_45, %c0_46, %c0_47], %31 {strides = array<i32>} : memref<4x8x1xf32, #tpu.memory_space<vmem>>, vector<4x8x1xf32>,
    %c0_i32_48 = arith.constant 0 : i32
    %52 = arith.cmpi eq, %arg1, %c0_i32_48 : i32
    %53 = arith.extui %52 : i1 to i32
    %c0_i32_49 = arith.constant 0 : i32
    %54 = arith.cmpi ne, %53, %c0_i32_49 : i32
    scf.if %54 {
      %c0_50 = arith.constant 0 : index
      %c0_51 = arith.constant 0 : index
      %c0_52 = arith.constant 0 : index
      %55 = vector.load %arg11[%c0_50, %c0_51, %c0_52] : memref<4x8x32xf32, #tpu.memory_space<vmem>>, vector<4x8x32xf32>
      %c0_53 = arith.constant 0 : index
      %c0_54 = arith.constant 0 : index
      %c0_55 = arith.constant 0 : index
      %56 = vector.load %arg10[%c0_53, %c0_54, %c0_55] : memref<4x8x1xf32, #tpu.memory_space<vmem>>, vector<4x8x1xf32>
      %57 = vector.broadcast %56 : vector<4x8x1xf32> to vector<4x8x32xf32>
      %58 = arith.divf %55, %57 : vector<4x8x32xf32>
      %c0_56 = arith.constant 0 : index
      %c0_57 = arith.constant 0 : index
      %c0_58 = arith.constant 0 : index
      %59 = vector.load %arg7[%c0_56, %c0_57, %c0_58] : memref<4x8x32xf32, #tpu.memory_space<vmem>>, vector<4x8x32xf32>
      tpu.vector_store %arg7[%c0_56, %c0_57, %c0_58], %58 {strides = array<i32>} : memref<4x8x32xf32, #tpu.memory_space<vmem>>, vector<4x8x32xf32>,
    } else {
    }
    return
  }
  func.func @transform_0(%arg0: i32, %arg1: i32) -> (i32, i32, i32) {
    %c0_i32 = arith.constant 0 : i32
    %c0_i32_0 = arith.constant 0 : i32
    %c0_i32_1 = arith.constant 0 : i32
    return %arg0, %c0_i32, %c0_i32_0 : i32, i32, i32
  }
  func.func @transform_1(%arg0: i32, %arg1: i32) -> (i32, i32, i32) {
    %c0_i32 = arith.constant 0 : i32
    %c0_i32_0 = arith.constant 0 : i32
    return %arg0, %arg1, %c0_i32 : i32, i32, i32
  }
  func.func @transform_2(%arg0: i32, %arg1: i32) -> (i32, i32, i32) {
    %c0_i32 = arith.constant 0 : i32
    %c0_i32_0 = arith.constant 0 : i32
    return %arg0, %arg1, %c0_i32 : i32, i32, i32
  }
  func.func @transform_3(%arg0: i32, %arg1: i32) -> (i32, i32, i32, i32) {
    %c0_i32 = arith.constant 0 : i32
    %c0_i32_0 = arith.constant 0 : i32
    %c0_i32_1 = arith.constant 0 : i32
    %c0_i32_2 = arith.constant 0 : i32
    return %arg0, %c0_i32, %c0_i32_0, %c0_i32_1 : i32, i32, i32, i32
  }
  func.func @transform_4(%arg0: i32, %arg1: i32) -> (i32, i32, i32, i32) {
    %c0_i32 = arith.constant 0 : i32
    %c0_i32_0 = arith.constant 0 : i32
    %c0_i32_1 = arith.constant 0 : i32
    %c0_i32_2 = arith.constant 0 : i32
    return %arg0, %c0_i32, %c0_i32_0, %c0_i32_1 : i32, i32, i32, i32
  }
  func.func @transform_5(%arg0: i32, %arg1: i32) -> (i32, i32, i32) {
    %c0_i32 = arith.constant 0 : i32
    %c0_i32_0 = arith.constant 0 : i32
    %c0_i32_1 = arith.constant 0 : i32
    return %arg0, %c0_i32, %c0_i32_0 : i32, i32, i32
  }
}

</mosaic_0001>

<llo_original>
// kernel: tpu_custom_call.1
$region0: #{tpu_custom_call.1}
  #allocation0 [shape = 'u32[]', space=smem, size = 0x4, offset = 0x4, fixed_abs, tag = 'smem constant byte address 0x4 - core index']
  #allocation1 [shape = 'u32[144,128]{1,0:T(1,128)}', space=vmem, size = 0x12000, scoped, tag = 'internal scratch']
  #allocation2 [shape = 'bf16[4,8,32]{2,1,0:T(8,128)(2,1)}', space=vmem, size = 0x2000, scoped, tag = 'scratch operand']
  #allocation3 [shape = 'f32[4,8,1]{2,1,0:T(8,128)}', space=vmem, size = 0x4000, scoped, tag = 'scratch operand']
  #allocation4 [shape = 'f32[4,8,1]{2,1,0:T(8,128)}', space=vmem, size = 0x4000, scoped, tag = 'scratch operand']
  #allocation5 [shape = 'f32[4,8,32]{2,1,0:T(8,128)}', space=vmem, size = 0x4000, scoped, tag = 'scratch operand']
  %s0 = inlined_call_operand.hbm [shape: f32[4,8,32], index: 0, kind: input, shape index: {}]
  %s1 = inlined_call_operand.hbm [shape: f32[4,8,32], index: 1, kind: input, shape index: {}]
  %s2 = inlined_call_operand.hbm [shape: f32[4,8,32], index: 2, kind: input, shape index: {}]
  %s3 = inlined_call_operand.hbm [shape: bf16[4,3,32,32], index: 3, kind: input, shape index: {}]
  %s4 = inlined_call_operand.hbm [shape: f32[4,3,1,32], index: 4, kind: input, shape index: {}]
  %s5 = inlined_call_operand.hbm [shape: f32[4,8,32], index: 5, kind: output, shape index: {}]
  %s6 = sld [smem:[#allocation0]]
  $region58: #{tpu_custom_call.1} parent=0
    _
  %s8 = ssub.s32 1, %s6
  %s9 = scalar_select 0, %s8, %s6
  $region1: #{tpu_custom_call.1} parent=0
    #allocation6 [shape = 'u8[16384]{0}', space=vmem, size = 0x4000, scoped, tag = 'input window, operand 0, single buffered']
    #allocation7 [shape = 's32[1]{0}', space=sflag, size = 0x4, scoped, tag = 'scoped memory for tpu_custom_call.1']
    #allocation8 [shape = 's32[1]{0}', space=sflag, size = 0x4, scoped, tag = 'scoped memory for tpu_custom_call.1']
    #allocation9 [shape = 'u8[16384]{0}', space=vmem, size = 0x4000, scoped, tag = 'input window, operand 1, single buffered']
    #allocation10 [shape = 's32[1]{0}', space=sflag, size = 0x4, scoped, tag = 'scoped memory for tpu_custom_call.1']
    #allocation11 [shape = 'u8[16384]{0}', space=vmem, size = 0x4000, scoped, tag = 'input window, operand 2, single buffered']
    #allocation12 [shape = 'u8[98304]{0}', space=vmem, size = 0x18000, scoped, tag = 'input window, operand 3, single buffered']
    #allocation13 [shape = 's32[1]{0}', space=sflag, size = 0x4, scoped, tag = 'scoped memory for tpu_custom_call.1']
    #allocation14 [shape = 'u8[6144]{0}', space=vmem, size = 0x1800, scoped, tag = 'input window, operand 4, single buffered']
    #allocation15 [shape = 'u8[16384]{0}', space=vmem, size = 0x4000, scoped, tag = 'output window, operand 0, single buffered']
    %10 = vsyncpa [#allocation7], 0
    %11 = vsyncpa [#allocation10], 0
    %12 = vsyncpa [#allocation13], 0
    %13 = vsyncpa [#allocation8], 0
    // Predicated region
    $region2: #{tpu_custom_call.1} parent=1 // pred_check
      _
    $region3: #{tpu_custom_call.1} parent=1 // pred_check_branch
      %15 = sbr.rel (0) target = $region5
    $region4: #{tpu_custom_call.1} parent=1 // pred_region
      %s17 = ssub.s32 512, 512
      %18 = vsyncadd [#allocation7], %s17
      %s19 = sshll.u32 [#allocation6], 4
      %s20 = int_to_ptr.vmem [resolvable:$true] %s19
      %25 = dma.hbm_to_vmem [thread:$0]  %s0, 512, %s20, [#allocation7], 128, 128, 8
    $region5: #{tpu_custom_call.1} parent=1 // pred_fallthru
      _
    // Predicated region
    $region6: #{tpu_custom_call.1} parent=1 // pred_check
      _
    $region7: #{tpu_custom_call.1} parent=1 // pred_check_branch
      %27 = sbr.rel (0) target = $region9
    $region8: #{tpu_custom_call.1} parent=1 // pred_region
      %s29 = ssub.s32 512, 512
      %30 = vsyncadd [#allocation10], %s29
      %s31 = sshll.u32 [#allocation9], 4
      %s32 = int_to_ptr.vmem [resolvable:$true] %s31
      %37 = dma.hbm_to_vmem [thread:$0]  %s1, 512, %s32, [#allocation10], 128, 128, 8
    $region9: #{tpu_custom_call.1} parent=1 // pred_fallthru
      _
    // Predicated region
    $region10: #{tpu_custom_call.1} parent=1 // pred_check
      _
    $region11: #{tpu_custom_call.1} parent=1 // pred_check_branch
      %39 = sbr.rel (0) target = $region13
    $region12: #{tpu_custom_call.1} parent=1 // pred_region
      %s41 = ssub.s32 512, 512
      %42 = vsyncadd [#allocation10], %s41
      %s43 = sshll.u32 [#allocation11], 4
      %s44 = int_to_ptr.vmem [resolvable:$true] %s43
      %49 = dma.hbm_to_vmem [thread:$0]  %s2, 512, %s44, [#allocation10], 128, 128, 8
    $region13: #{tpu_custom_call.1} parent=1 // pred_fallthru
      _
    // Predicated region
    $region14: #{tpu_custom_call.1} parent=1 // pred_check
      _
    $region15: #{tpu_custom_call.1} parent=1 // pred_check_branch
      %51 = sbr.rel (0) target = $region17
    $region16: #{tpu_custom_call.1} parent=1 // pred_region
      %s53 = ssub.s32 3072, 3072
      %54 = vsyncadd [#allocation13], %s53
      %s55 = sshll.u32 [#allocation12], 4
      %s56 = int_to_ptr.vmem [resolvable:$true] %s55
      %61 = dma.hbm_to_vmem [thread:$0]  %s3, 3072, %s56, [#allocation13], 64, 64, 4
    $region17: #{tpu_custom_call.1} parent=1 // pred_fallthru
      _
    // Predicated region
    $region18: #{tpu_custom_call.1} parent=1 // pred_check
      _
    $region19: #{tpu_custom_call.1} parent=1 // pred_check_branch
      %63 = sbr.rel (0) target = $region21
    $region20: #{tpu_custom_call.1} parent=1 // pred_region
      %s65 = ssub.s32 192, 192
      %66 = vsyncadd [#allocation13], %s65
      %s67 = sshll.u32 [#allocation14], 4
      %s68 = int_to_ptr.vmem [resolvable:$true] %s67
      %73 = dma.hbm_to_vmem [thread:$0]  %s4, 192, %s68, [#allocation13], 16, 16, 1
    $region21: #{tpu_custom_call.1} parent=1 // pred_fallthru
      _
    // Predicated region
    $region22: #{tpu_custom_call.1} parent=1 // pred_check
      _
    $region23: #{tpu_custom_call.1} parent=1 // pred_check_branch
      %75 = sbr.rel (0) target = $region25
    $region24: #{tpu_custom_call.1} parent=1 // pred_region
      %76 = dma.done [#allocation7], 512
    $region25: #{tpu_custom_call.1} parent=1 // pred_fallthru
      _
    // Predicated region
    $region26: #{tpu_custom_call.1} parent=1 // pred_check
      _
    $region27: #{tpu_custom_call.1} parent=1 // pred_check_branch
      %78 = sbr.rel (0) target = $region29
    $region28: #{tpu_custom_call.1} parent=1 // pred_region
      %79 = dma.done [#allocation10], 512
    $region29: #{tpu_custom_call.1} parent=1 // pred_fallthru
      _
    // Predicated region
    $region30: #{tpu_custom_call.1} parent=1 // pred_check
      _
    $region31: #{tpu_custom_call.1} parent=1 // pred_check_branch
      %81 = sbr.rel (0) target = $region33
    $region32: #{tpu_custom_call.1} parent=1 // pred_region
      %82 = dma.done [#allocation10], 512
    $region33: #{tpu_custom_call.1} parent=1 // pred_fallthru
      _
    // Predicated region
    $region34: #{tpu_custom_call.1} parent=1 // pred_check
      _
    $region35: #{tpu_custom_call.1} parent=1 // pred_check_branch
      %84 = sbr.rel (0) target = $region37
    $region36: #{tpu_custom_call.1} parent=1 // pred_region
      %85 = dma.done [#allocation13], 3072
    $region37: #{tpu_custom_call.1} parent=1 // pred_fallthru
      _
    // Predicated region
    $region38: #{tpu_custom_call.1} parent=1 // pred_check
      _
    $region39: #{tpu_custom_call.1} parent=1 // pred_check_branch
      %87 = sbr.rel (0) target = $region41
    $region40: #{tpu_custom_call.1} parent=1 // pred_region
      %88 = dma.done [#allocation13], 192
    $region41: #{tpu_custom_call.1} parent=1 // pred_fallthru
      _
    %p90 = scmp.eq.s32.totalorder 0, 0
    // Predicated region
    $region42: #{tpu_custom_call.1} parent=1 // pred_check
      %p91 = pneg %p90
    $region43: #{tpu_custom_call.1} parent=1 // pred_check_branch
      %93 = sbr.rel (%p91) target = $region45
    $region44: #{tpu_custom_call.1} parent=1 // pred_region
      %v94 = vld [vmem:[#allocation6] sm:$0xff]
      %v95 = vld [vmem:[#allocation6 + $0x8] sm:$0xff]
      %v96 = vld [vmem:[#allocation6 + $0x10] sm:$0xff]
      %v97 = vld [vmem:[#allocation6 + $0x18] sm:$0xff]
      %v98 = vld [vmem:[#allocation12] sm:$0xf]
      %v99 = vld [vmem:[#allocation12 + $0x4] sm:$0xf]
      %v100 = vld [vmem:[#allocation12 + $0x8] sm:$0xf]
      %v101 = vld [vmem:[#allocation12 + $0xc] sm:$0xf]
      %v102 = vld [vmem:[#allocation12 + $0x30] sm:$0xf]
      %v103 = vld [vmem:[#allocation12 + $0x34] sm:$0xf]
      %v104 = vld [vmem:[#allocation12 + $0x38] sm:$0xf]
      %v105 = vld [vmem:[#allocation12 + $0x3c] sm:$0xf]
      %v106 = vld [vmem:[#allocation12 + $0x60] sm:$0xf]
      %v107 = vld [vmem:[#allocation12 + $0x64] sm:$0xf]
      %v108 = vld [vmem:[#allocation12 + $0x68] sm:$0xf]
      %v109 = vld [vmem:[#allocation12 + $0x6c] sm:$0xf]
      %v110 = vld [vmem:[#allocation12 + $0x90] sm:$0xf]
      %v111 = vld [vmem:[#allocation12 + $0x94] sm:$0xf]
      %v112 = vld [vmem:[#allocation12 + $0x98] sm:$0xf]
      %v113 = vld [vmem:[#allocation12 + $0x9c] sm:$0xf]
      %v114 = vld [vmem:[#allocation14] sm:$0x1]
      %v115 = vld [vmem:[#allocation14 + $0x3] sm:$0x1]
      %v116 = vld [vmem:[#allocation14 + $0x6] sm:$0x1]
      %v117 = vld [vmem:[#allocation14 + $0x9] sm:$0x1]
      %v118 = vpack.c.bf16 %v94, %v94
      %v119 = vpack.c.bf16 %v95, %v95
      %v120 = vpack.c.bf16 %v96, %v96
      %v121 = vpack.c.bf16 %v97, %v97
      %v126 = vlaneseq
      %v127 = vshrl.u32 %v126, 7
      %v128 = vsub.s32 0, %v127
      %v129 = vrot.slane %v114, %v128
      %v130 = vlaneseq
      %v131 = vshrl.u32 %v130, 7
      %v132 = vsub.s32 0, %v131
      %v133 = vrot.slane %v115, %v132
      %v134 = vlaneseq
      %v135 = vshrl.u32 %v134, 7
      %v136 = vsub.s32 0, %v135
      %v137 = vrot.slane %v116, %v136
      %v138 = vlaneseq
      %v139 = vshrl.u32 %v138, 7
      %v140 = vsub.s32 0, %v139
      %v141 = vrot.slane %v117, %v140
      %v150 = vunpack.c.l.b16 %v98
      %v151 = vunpack.c.l.b16 %v99
      %v152 = vunpack.c.l.b16 %v100
      %v153 = vunpack.c.l.b16 %v101
      %v154 = vpack.c.b16 %v151, %v150
      %v155 = vpack.c.b16 %v153, %v152
      %vm158 = vcmask 261120
      %v160 = vsel %vm158, %v118, 0
      %162 = vmatprep.subr.bf16.mxu0 0
      %163 = vmatpush1.bf16.msra.mxu0 0
      %164 = vmatprep.subr.bf16.mxu0 0
      %165 = vmatpush1.bf16.msra.mxu0 0
      %166 = vmatprep.subr.bf16.mxu0 0
      %167 = vmatpush1.bf16.msra.mxu0 0
      %168 = vmatprep.subr.bf16.mxu0 0
      %169 = vmatpush1.bf16.msra.mxu0 0
      %170 = vmatprep.subr.bf16.mxu0 0
      %171 = vmatpush1.bf16.msra.mxu0 0
      %172 = vmatprep.subr.bf16.mxu0 0
      %173 = vmatpush1.bf16.msra.mxu0 0
      %174 = vmatprep.subr.bf16.mxu0 0
      %175 = vmatpush1.bf16.msra.mxu0 %v155
      %176 = vmatprep.subr.bf16.mxu0 0
      %177 = vmatpush1.bf16.msra.mxu0 %v154
      %178 = vmatprep.subr.bf16.mxu0 0
      %179 = vmatpush2.bf16.msra.mxu0 0
      %180 = vmatprep.subr.bf16.mxu0 0
      %181 = vmatpush2.bf16.msra.mxu0 0
      %182 = vmatprep.subr.bf16.mxu0 0
      %183 = vmatpush2.bf16.msra.mxu0 0
      %184 = vmatprep.subr.bf16.mxu0 0
      %185 = vmatpush2.bf16.msra.mxu0 0
      %186 = vmatprep.subr.bf16.mxu0 0
      %187 = vmatpush2.bf16.msra.mxu0 0
      %188 = vmatprep.subr.bf16.mxu0 0
      %189 = vmatpush2.bf16.msra.mxu0 0
      %190 = vmatprep.subr.bf16.mxu0 0
      %191 = vmatpush2.bf16.msra.mxu0 0
      %192 = vmatprep.subr.bf16.mxu0 0
      %193 = vmatpush2.bf16.msra.mxu0 0
      %194 = vmatprep.mubr.bf16.mxu0 0
      %195 = vmatmul.mubr.bf16.gmra.mxu0 %v160
      %v196 = vpop.f32.mrf.mxu0
      %v197 = vadd.f32 %v129, %v196
      %v198 = vpop.f32.mrf.mxu0
      %v199 = vpop.f32.mrf.mxu0
      %v200 = vpop.f32.mrf.mxu0
      %201 = vdwg.mxu0
      %v206 = vunpack.c.l.b16 %v102
      %v207 = vunpack.c.l.b16 %v103
      %v208 = vunpack.c.l.b16 %v104
      %v209 = vunpack.c.l.b16 %v105
      %v210 = vpack.c.b16 %v207, %v206
      %v211 = vpack.c.b16 %v209, %v208
      %v215 = vsel %vm158, %v119, 0
      %217 = vmatprep.subr.bf16.mxu0 0
      %218 = vmatpush1.bf16.msra.mxu0 0
      %219 = vmatprep.subr.bf16.mxu0 0
      %220 = vmatpush1.bf16.msra.mxu0 0
      %221 = vmatprep.subr.bf16.mxu0 0
      %222 = vmatpush1.bf16.msra.mxu0 0
      %223 = vmatprep.subr.bf16.mxu0 0
      %224 = vmatpush1.bf16.msra.mxu0 0
      %225 = vmatprep.subr.bf16.mxu0 0
      %226 = vmatpush1.bf16.msra.mxu0 0
      %227 = vmatprep.subr.bf16.mxu0 0
      %228 = vmatpush1.bf16.msra.mxu0 0
      %229 = vmatprep.subr.bf16.mxu0 0
      %230 = vmatpush1.bf16.msra.mxu0 %v211
      %231 = vmatprep.subr.bf16.mxu0 0
      %232 = vmatpush1.bf16.msra.mxu0 %v210
      %233 = vmatprep.subr.bf16.mxu0 0
      %234 = vmatpush2.bf16.msra.mxu0 0
      %235 = vmatprep.subr.bf16.mxu0 0
      %236 = vmatpush2.bf16.msra.mxu0 0
      %237 = vmatprep.subr.bf16.mxu0 0
      %238 = vmatpush2.bf16.msra.mxu0 0
      %239 = vmatprep.subr.bf16.mxu0 0
      %240 = vmatpush2.bf16.msra.mxu0 0
      %241 = vmatprep.subr.bf16.mxu0 0
      %242 = vmatpush2.bf16.msra.mxu0 0
      %243 = vmatprep.subr.bf16.mxu0 0
      %244 = vmatpush2.bf16.msra.mxu0 0
      %245 = vmatprep.subr.bf16.mxu0 0
      %246 = vmatpush2.bf16.msra.mxu0 0
      %247 = vmatprep.subr.bf16.mxu0 0
      %248 = vmatpush2.bf16.msra.mxu0 0
      %249 = vmatprep.mubr.bf16.mxu0 0
      %250 = vmatmul.mubr.bf16.gmra.mxu0 %v215
      %v251 = vpop.f32.mrf.mxu0
      %v252 = vadd.f32 %v133, %v251
      %v253 = vpop.f32.mrf.mxu0
      %v254 = vpop.f32.mrf.mxu0
      %v255 = vpop.f32.mrf.mxu0
      %256 = vdwg.mxu0
      %v261 = vunpack.c.l.b16 %v106
      %v262 = vunpack.c.l.b16 %v107
      %v263 = vunpack.c.l.b16 %v108
      %v264 = vunpack.c.l.b16 %v109
      %v265 = vpack.c.b16 %v262, %v261
      %v266 = vpack.c.b16 %v264, %v263
      %v270 = vsel %vm158, %v120, 0
      %272 = vmatprep.subr.bf16.mxu0 0
      %273 = vmatpush1.bf16.msra.mxu0 0
      %274 = vmatprep.subr.bf16.mxu0 0
      %275 = vmatpush1.bf16.msra.mxu0 0
      %276 = vmatprep.subr.bf16.mxu0 0
      %277 = vmatpush1.bf16.msra.mxu0 0
      %278 = vmatprep.subr.bf16.mxu0 0
      %279 = vmatpush1.bf16.msra.mxu0 0
      %280 = vmatprep.subr.bf16.mxu0 0
      %281 = vmatpush1.bf16.msra.mxu0 0
      %282 = vmatprep.subr.bf16.mxu0 0
      %283 = vmatpush1.bf16.msra.mxu0 0
      %284 = vmatprep.subr.bf16.mxu0 0
      %285 = vmatpush1.bf16.msra.mxu0 %v266
      %286 = vmatprep.subr.bf16.mxu0 0
      %287 = vmatpush1.bf16.msra.mxu0 %v265
      %288 = vmatprep.subr.bf16.mxu0 0
      %289 = vmatpush2.bf16.msra.mxu0 0
      %290 = vmatprep.subr.bf16.mxu0 0
      %291 = vmatpush2.bf16.msra.mxu0 0
      %292 = vmatprep.subr.bf16.mxu0 0
      %293 = vmatpush2.bf16.msra.mxu0 0
      %294 = vmatprep.subr.bf16.mxu0 0
      %295 = vmatpush2.bf16.msra.mxu0 0
      %296 = vmatprep.subr.bf16.mxu0 0
      %297 = vmatpush2.bf16.msra.mxu0 0
      %298 = vmatprep.subr.bf16.mxu0 0
      %299 = vmatpush2.bf16.msra.mxu0 0
      %300 = vmatprep.subr.bf16.mxu0 0
      %301 = vmatpush2.bf16.msra.mxu0 0
      %302 = vmatprep.subr.bf16.mxu0 0
      %303 = vmatpush2.bf16.msra.mxu0 0
      %304 = vmatprep.mubr.bf16.mxu0 0
      %305 = vmatmul.mubr.bf16.gmra.mxu0 %v270
      %v306 = vpop.f32.mrf.mxu0
      %v307 = vadd.f32 %v137, %v306
      %v308 = vpop.f32.mrf.mxu0
      %v309 = vpop.f32.mrf.mxu0
      %v310 = vpop.f32.mrf.mxu0
      %311 = vdwg.mxu0
      %v316 = vunpack.c.l.b16 %v110
      %v317 = vunpack.c.l.b16 %v111
      %v318 = vunpack.c.l.b16 %v112
      %v319 = vunpack.c.l.b16 %v113
      %v320 = vpack.c.b16 %v317, %v316
      %v321 = vpack.c.b16 %v319, %v318
      %v325 = vsel %vm158, %v121, 0
      %327 = vmatprep.subr.bf16.mxu0 0
      %328 = vmatpush1.bf16.msra.mxu0 0
      %329 = vmatprep.subr.bf16.mxu0 0
      %330 = vmatpush1.bf16.msra.mxu0 0
      %331 = vmatprep.subr.bf16.mxu0 0
      %332 = vmatpush1.bf16.msra.mxu0 0
      %333 = vmatprep.subr.bf16.mxu0 0
      %334 = vmatpush1.bf16.msra.mxu0 0
      %335 = vmatprep.subr.bf16.mxu0 0
      %336 = vmatpush1.bf16.msra.mxu0 0
      %337 = vmatprep.subr.bf16.mxu0 0
      %338 = vmatpush1.bf16.msra.mxu0 0
      %339 = vmatprep.subr.bf16.mxu0 0
      %340 = vmatpush1.bf16.msra.mxu0 %v321
      %341 = vmatprep.subr.bf16.mxu0 0
      %342 = vmatpush1.bf16.msra.mxu0 %v320
      %343 = vmatprep.subr.bf16.mxu0 0
      %344 = vmatpush2.bf16.msra.mxu0 0
      %345 = vmatprep.subr.bf16.mxu0 0
      %346 = vmatpush2.bf16.msra.mxu0 0
      %347 = vmatprep.subr.bf16.mxu0 0
      %348 = vmatpush2.bf16.msra.mxu0 0
      %349 = vmatprep.subr.bf16.mxu0 0
      %350 = vmatpush2.bf16.msra.mxu0 0
      %351 = vmatprep.subr.bf16.mxu0 0
      %352 = vmatpush2.bf16.msra.mxu0 0
      %353 = vmatprep.subr.bf16.mxu0 0
      %354 = vmatpush2.bf16.msra.mxu0 0
      %355 = vmatprep.subr.bf16.mxu0 0
      %356 = vmatpush2.bf16.msra.mxu0 0
      %357 = vmatprep.subr.bf16.mxu0 0
      %358 = vmatpush2.bf16.msra.mxu0 0
      %359 = vmatprep.mubr.bf16.mxu0 0
      %360 = vmatmul.mubr.bf16.gmra.mxu0 %v325
      %v361 = vpop.f32.mrf.mxu0
      %v362 = vadd.f32 %v141, %v361
      %v363 = vpop.f32.mrf.mxu0
      %v364 = vpop.f32.mrf.mxu0
      %v365 = vpop.f32.mrf.mxu0
      %366 = vdwg.mxu0
      %v367 = vmax.f32 %v197, 0.0
      %v368 = vmax.f32 %v252, 0.0
      %v369 = vmax.f32 %v307, 0.0
      %v370 = vmax.f32 %v362, 0.0
      %v371 = vpack.c.bf16 %v367, %v367
      %v372 = vpack.c.bf16 %v368, %v368
      %v373 = vpack.c.bf16 %v369, %v369
      %v374 = vpack.c.bf16 %v370, %v370
      %vm375 = vcmask 257024
      %376 = vst.msk [vmem:[#allocation2] sm:$0xf] %vm375, %v371
      %377 = vst.msk [vmem:[#allocation2 + $0x4] sm:$0xf] %vm375, %v372
      %378 = vst.msk [vmem:[#allocation2 + $0x8] sm:$0xf] %vm375, %v373
      %379 = vst.msk [vmem:[#allocation2 + $0xc] sm:$0xf] %vm375, %v374
      %vm380 = vcmask 7168
      %381 = vst.msk [vmem:[#allocation3] sm:$0xff] %vm380, -inf
      %382 = vst.msk [vmem:[#allocation3 + $0x8] sm:$0xff] %vm380, -inf
      %383 = vst.msk [vmem:[#allocation3 + $0x10] sm:$0xff] %vm380, -inf
      %384 = vst.msk [vmem:[#allocation3 + $0x18] sm:$0xff] %vm380, -inf
      %385 = vst.msk [vmem:[#allocation4] sm:$0xff] %vm380, 0.0
      %386 = vst.msk [vmem:[#allocation4 + $0x8] sm:$0xff] %vm380, 0.0
      %387 = vst.msk [vmem:[#allocation4 + $0x10] sm:$0xff] %vm380, 0.0
      %388 = vst.msk [vmem:[#allocation4 + $0x18] sm:$0xff] %vm380, 0.0
      %389 = vst.msk [vmem:[#allocation5] sm:$0xff] %vm158, 0.0
      %390 = vst.msk [vmem:[#allocation5 + $0x8] sm:$0xff] %vm158, 0.0
      %391 = vst.msk [vmem:[#allocation5 + $0x10] sm:$0xff] %vm158, 0.0
      %392 = vst.msk [vmem:[#allocation5 + $0x18] sm:$0xff] %vm158, 0.0
    $region45: #{tpu_custom_call.1} parent=1 // pred_fallthru
      _
    %v393 = vld [vmem:[#allocation9] sm:$0xff]
    %v394 = vld [vmem:[#allocation9 + $0x8] sm:$0xff]
    %v395 = vld [vmem:[#allocation9 + $0x10] sm:$0xff]
    %v396 = vld [vmem:[#allocation9 + $0x18] sm:$0xff]
    %s397 = scalar_lea.vmem [#allocation12], 16
    %v398 = vld [vmem:[%s397] sm:$0xf]
    %v399 = vld [vmem:[%s397 + $0x4] sm:$0xf]
    %v400 = vld [vmem:[%s397 + $0x8] sm:$0xf]
    %v401 = vld [vmem:[%s397 + $0xc] sm:$0xf]
    %v402 = vld [vmem:[%s397 + $0x30] sm:$0xf]
    %v403 = vld [vmem:[%s397 + $0x34] sm:$0xf]
    %v404 = vld [vmem:[%s397 + $0x38] sm:$0xf]
    %v405 = vld [vmem:[%s397 + $0x3c] sm:$0xf]
    %v406 = vld [vmem:[%s397 + $0x60] sm:$0xf]
    %v407 = vld [vmem:[%s397 + $0x64] sm:$0xf]
    %v408 = vld [vmem:[%s397 + $0x68] sm:$0xf]
    %v409 = vld [vmem:[%s397 + $0x6c] sm:$0xf]
    %v410 = vld [vmem:[%s397 + $0x90] sm:$0xf]
    %v411 = vld [vmem:[%s397 + $0x94] sm:$0xf]
    %v412 = vld [vmem:[%s397 + $0x98] sm:$0xf]
    %v413 = vld [vmem:[%s397 + $0x9c] sm:$0xf]
    %s414 = scalar_lea.vmem [#allocation14], 1
    %v415 = vld [vmem:[%s414] sm:$0x1]
    %v416 = vld [vmem:[%s414 + $0x3] sm:$0x1]
    %v417 = vld [vmem:[%s414 + $0x6] sm:$0x1]
    %v418 = vld [vmem:[%s414 + $0x9] sm:$0x1]
    %v419 = vpack.c.bf16 %v393, %v393
    %v420 = vpack.c.bf16 %v394, %v394
    %v421 = vpack.c.bf16 %v395, %v395
    %v422 = vpack.c.bf16 %v396, %v396
    %v427 = vlaneseq
    %v428 = vshrl.u32 %v427, 7
    %v429 = vsub.s32 0, %v428
    %v430 = vrot.slane %v415, %v429
    %v431 = vlaneseq
    %v432 = vshrl.u32 %v431, 7
    %v433 = vsub.s32 0, %v432
    %v434 = vrot.slane %v416, %v433
    %v435 = vlaneseq
    %v436 = vshrl.u32 %v435, 7
    %v437 = vsub.s32 0, %v436
    %v438 = vrot.slane %v417, %v437
    %v439 = vlaneseq
    %v440 = vshrl.u32 %v439, 7
    %v441 = vsub.s32 0, %v440
    %v442 = vrot.slane %v418, %v441
    %v451 = vunpack.c.l.b16 %v398
    %v452 = vunpack.c.l.b16 %v399
    %v453 = vunpack.c.l.b16 %v400
    %v454 = vunpack.c.l.b16 %v401
    %v455 = vpack.c.b16 %v452, %v451
    %v456 = vpack.c.b16 %v454, %v453
    %vm459 = vcmask 261120
    %v461 = vsel %vm459, %v419, 0
    %463 = vmatprep.subr.bf16.mxu0 0
    %464 = vmatpush1.bf16.msra.mxu0 0
    %465 = vmatprep.subr.bf16.mxu0 0
    %466 = vmatpush1.bf16.msra.mxu0 0
    %467 = vmatprep.subr.bf16.mxu0 0
    %468 = vmatpush1.bf16.msra.mxu0 0
    %469 = vmatprep.subr.bf16.mxu0 0
    %470 = vmatpush1.bf16.msra.mxu0 0
    %471 = vmatprep.subr.bf16.mxu0 0
    %472 = vmatpush1.bf16.msra.mxu0 0
    %473 = vmatprep.subr.bf16.mxu0 0
    %474 = vmatpush1.bf16.msra.mxu0 0
    %475 = vmatprep.subr.bf16.mxu0 0
    %476 = vmatpush1.bf16.msra.mxu0 %v456
    %477 = vmatprep.subr.bf16.mxu0 0
    %478 = vmatpush1.bf16.msra.mxu0 %v455
    %479 = vmatprep.subr.bf16.mxu0 0
    %480 = vmatpush2.bf16.msra.mxu0 0
    %481 = vmatprep.subr.bf16.mxu0 0
    %482 = vmatpush2.bf16.msra.mxu0 0
    %483 = vmatprep.subr.bf16.mxu0 0
    %484 = vmatpush2.bf16.msra.mxu0 0
    %485 = vmatprep.subr.bf16.mxu0 0
    %486 = vmatpush2.bf16.msra.mxu0 0
    %487 = vmatprep.subr.bf16.mxu0 0
    %488 = vmatpush2.bf16.msra.mxu0 0
    %489 = vmatprep.subr.bf16.mxu0 0
    %490 = vmatpush2.bf16.msra.mxu0 0
    %491 = vmatprep.subr.bf16.mxu0 0
    %492 = vmatpush2.bf16.msra.mxu0 0
    %493 = vmatprep.subr.bf16.mxu0 0
    %494 = vmatpush2.bf16.msra.mxu0 0
    %495 = vmatprep.mubr.bf16.mxu0 0
    %496 = vmatmul.mubr.bf16.gmra.mxu0 %v461
    %v497 = vpop.f32.mrf.mxu0
    %v498 = vadd.f32 %v430, %v497
    %v499 = vpop.f32.mrf.mxu0
    %v500 = vpop.f32.mrf.mxu0
    %v501 = vpop.f32.mrf.mxu0
    %502 = vdwg.mxu0
    %v507 = vunpack.c.l.b16 %v402
    %v508 = vunpack.c.l.b16 %v403
    %v509 = vunpack.c.l.b16 %v404
    %v510 = vunpack.c.l.b16 %v405
    %v511 = vpack.c.b16 %v508, %v507
    %v512 = vpack.c.b16 %v510, %v509
    %v516 = vsel %vm459, %v420, 0
    %518 = vmatprep.subr.bf16.mxu0 0
    %519 = vmatpush1.bf16.msra.mxu0 0
    %520 = vmatprep.subr.bf16.mxu0 0
    %521 = vmatpush1.bf16.msra.mxu0 0
    %522 = vmatprep.subr.bf16.mxu0 0
    %523 = vmatpush1.bf16.msra.mxu0 0
    %524 = vmatprep.subr.bf16.mxu0 0
    %525 = vmatpush1.bf16.msra.mxu0 0
    %526 = vmatprep.subr.bf16.mxu0 0
    %527 = vmatpush1.bf16.msra.mxu0 0
    %528 = vmatprep.subr.bf16.mxu0 0
    %529 = vmatpush1.bf16.msra.mxu0 0
    %530 = vmatprep.subr.bf16.mxu0 0
    %531 = vmatpush1.bf16.msra.mxu0 %v512
    %532 = vmatprep.subr.bf16.mxu0 0
    %533 = vmatpush1.bf16.msra.mxu0 %v511
    %534 = vmatprep.subr.bf16.mxu0 0
    %535 = vmatpush2.bf16.msra.mxu0 0
    %536 = vmatprep.subr.bf16.mxu0 0
    %537 = vmatpush2.bf16.msra.mxu0 0
    %538 = vmatprep.subr.bf16.mxu0 0
    %539 = vmatpush2.bf16.msra.mxu0 0
    %540 = vmatprep.subr.bf16.mxu0 0
    %541 = vmatpush2.bf16.msra.mxu0 0
    %542 = vmatprep.subr.bf16.mxu0 0
    %543 = vmatpush2.bf16.msra.mxu0 0
    %544 = vmatprep.subr.bf16.mxu0 0
    %545 = vmatpush2.bf16.msra.mxu0 0
    %546 = vmatprep.subr.bf16.mxu0 0
    %547 = vmatpush2.bf16.msra.mxu0 0
    %548 = vmatprep.subr.bf16.mxu0 0
    %549 = vmatpush2.bf16.msra.mxu0 0
    %550 = vmatprep.mubr.bf16.mxu0 0
    %551 = vmatmul.mubr.bf16.gmra.mxu0 %v516
    %v552 = vpop.f32.mrf.mxu0
    %v553 = vadd.f32 %v434, %v552
    %v554 = vpop.f32.mrf.mxu0
    %v555 = vpop.f32.mrf.mxu0
    %v556 = vpop.f32.mrf.mxu0
    %557 = vdwg.mxu0
    %v562 = vunpack.c.l.b16 %v406
    %v563 = vunpack.c.l.b16 %v407
    %v564 = vunpack.c.l.b16 %v408
    %v565 = vunpack.c.l.b16 %v409
    %v566 = vpack.c.b16 %v563, %v562
    %v567 = vpack.c.b16 %v565, %v564
    %v571 = vsel %vm459, %v421, 0
    %573 = vmatprep.subr.bf16.mxu0 0
    %574 = vmatpush1.bf16.msra.mxu0 0
    %575 = vmatprep.subr.bf16.mxu0 0
    %576 = vmatpush1.bf16.msra.mxu0 0
    %577 = vmatprep.subr.bf16.mxu0 0
    %578 = vmatpush1.bf16.msra.mxu0 0
    %579 = vmatprep.subr.bf16.mxu0 0
    %580 = vmatpush1.bf16.msra.mxu0 0
    %581 = vmatprep.subr.bf16.mxu0 0
    %582 = vmatpush1.bf16.msra.mxu0 0
    %583 = vmatprep.subr.bf16.mxu0 0
    %584 = vmatpush1.bf16.msra.mxu0 0
    %585 = vmatprep.subr.bf16.mxu0 0
    %586 = vmatpush1.bf16.msra.mxu0 %v567
    %587 = vmatprep.subr.bf16.mxu0 0
    %588 = vmatpush1.bf16.msra.mxu0 %v566
    %589 = vmatprep.subr.bf16.mxu0 0
    %590 = vmatpush2.bf16.msra.mxu0 0
    %591 = vmatprep.subr.bf16.mxu0 0
    %592 = vmatpush2.bf16.msra.mxu0 0
    %593 = vmatprep.subr.bf16.mxu0 0
    %594 = vmatpush2.bf16.msra.mxu0 0
    %595 = vmatprep.subr.bf16.mxu0 0
    %596 = vmatpush2.bf16.msra.mxu0 0
    %597 = vmatprep.subr.bf16.mxu0 0
    %598 = vmatpush2.bf16.msra.mxu0 0
    %599 = vmatprep.subr.bf16.mxu0 0
    %600 = vmatpush2.bf16.msra.mxu0 0
    %601 = vmatprep.subr.bf16.mxu0 0
    %602 = vmatpush2.bf16.msra.mxu0 0
    %603 = vmatprep.subr.bf16.mxu0 0
    %604 = vmatpush2.bf16.msra.mxu0 0
    %605 = vmatprep.mubr.bf16.mxu0 0
    %606 = vmatmul.mubr.bf16.gmra.mxu0 %v571
    %v607 = vpop.f32.mrf.mxu0
    %v608 = vadd.f32 %v438, %v607
    %v609 = vpop.f32.mrf.mxu0
    %v610 = vpop.f32.mrf.mxu0
    %v611 = vpop.f32.mrf.mxu0
    %612 = vdwg.mxu0
    %v617 = vunpack.c.l.b16 %v410
    %v618 = vunpack.c.l.b16 %v411
    %v619 = vunpack.c.l.b16 %v412
    %v620 = vunpack.c.l.b16 %v413
    %v621 = vpack.c.b16 %v618, %v617
    %v622 = vpack.c.b16 %v620, %v619
    %v626 = vsel %vm459, %v422, 0
    %628 = vmatprep.subr.bf16.mxu0 0
    %629 = vmatpush1.bf16.msra.mxu0 0
    %630 = vmatprep.subr.bf16.mxu0 0
    %631 = vmatpush1.bf16.msra.mxu0 0
    %632 = vmatprep.subr.bf16.mxu0 0
    %633 = vmatpush1.bf16.msra.mxu0 0
    %634 = vmatprep.subr.bf16.mxu0 0
    %635 = vmatpush1.bf16.msra.mxu0 0
    %636 = vmatprep.subr.bf16.mxu0 0
    %637 = vmatpush1.bf16.msra.mxu0 0
    %638 = vmatprep.subr.bf16.mxu0 0
    %639 = vmatpush1.bf16.msra.mxu0 0
    %640 = vmatprep.subr.bf16.mxu0 0
    %641 = vmatpush1.bf16.msra.mxu0 %v622
    %642 = vmatprep.subr.bf16.mxu0 0
    %643 = vmatpush1.bf16.msra.mxu0 %v621
    %644 = vmatprep.subr.bf16.mxu0 0
    %645 = vmatpush2.bf16.msra.mxu0 0
    %646 = vmatprep.subr.bf16.mxu0 0
    %647 = vmatpush2.bf16.msra.mxu0 0
    %648 = vmatprep.subr.bf16.mxu0 0
    %649 = vmatpush2.bf16.msra.mxu0 0
    %650 = vmatprep.subr.bf16.mxu0 0
    %651 = vmatpush2.bf16.msra.mxu0 0
    %652 = vmatprep.subr.bf16.mxu0 0
    %653 = vmatpush2.bf16.msra.mxu0 0
    %654 = vmatprep.subr.bf16.mxu0 0
    %655 = vmatpush2.bf16.msra.mxu0 0
    %656 = vmatprep.subr.bf16.mxu0 0
    %657 = vmatpush2.bf16.msra.mxu0 0
    %658 = vmatprep.subr.bf16.mxu0 0
    %659 = vmatpush2.bf16.msra.mxu0 0
    %660 = vmatprep.mubr.bf16.mxu0 0
    %661 = vmatmul.mubr.bf16.gmra.mxu0 %v626
    %v662 = vpop.f32.mrf.mxu0
    %v663 = vadd.f32 %v442, %v662
    %v664 = vpop.f32.mrf.mxu0
    %v665 = vpop.f32.mrf.mxu0
    %v666 = vpop.f32.mrf.mxu0
    %667 = vdwg.mxu0
    %v668 = vmax.f32 %v498, 0.0
    %v669 = vmax.f32 %v553, 0.0
    %v670 = vmax.f32 %v608, 0.0
    %v671 = vmax.f32 %v663, 0.0
    %v672 = vld [vmem:[#allocation11] sm:$0xff]
    %v673 = vld [vmem:[#allocation11 + $0x8] sm:$0xff]
    %v674 = vld [vmem:[#allocation11 + $0x10] sm:$0xff]
    %v675 = vld [vmem:[#allocation11 + $0x18] sm:$0xff]
    %s676 = scalar_lea.vmem [#allocation12], 32
    %v677 = vld [vmem:[%s676] sm:$0xf]
    %v678 = vld [vmem:[%s676 + $0x4] sm:$0xf]
    %v679 = vld [vmem:[%s676 + $0x8] sm:$0xf]
    %v680 = vld [vmem:[%s676 + $0xc] sm:$0xf]
    %v681 = vld [vmem:[%s676 + $0x30] sm:$0xf]
    %v682 = vld [vmem:[%s676 + $0x34] sm:$0xf]
    %v683 = vld [vmem:[%s676 + $0x38] sm:$0xf]
    %v684 = vld [vmem:[%s676 + $0x3c] sm:$0xf]
    %v685 = vld [vmem:[%s676 + $0x60] sm:$0xf]
    %v686 = vld [vmem:[%s676 + $0x64] sm:$0xf]
    %v687 = vld [vmem:[%s676 + $0x68] sm:$0xf]
    %v688 = vld [vmem:[%s676 + $0x6c] sm:$0xf]
    %v689 = vld [vmem:[%s676 + $0x90] sm:$0xf]
    %v690 = vld [vmem:[%s676 + $0x94] sm:$0xf]
    %v691 = vld [vmem:[%s676 + $0x98] sm:$0xf]
    %v692 = vld [vmem:[%s676 + $0x9c] sm:$0xf]
    %s693 = scalar_lea.vmem [#allocation14], 2
    %v694 = vld [vmem:[%s693] sm:$0x1]
    %v695 = vld [vmem:[%s693 + $0x3] sm:$0x1]
    %v696 = vld [vmem:[%s693 + $0x6] sm:$0x1]
    %v697 = vld [vmem:[%s693 + $0x9] sm:$0x1]
    %v698 = vpack.c.bf16 %v672, %v672
    %v699 = vpack.c.bf16 %v673, %v673
    %v700 = vpack.c.bf16 %v674, %v674
    %v701 = vpack.c.bf16 %v675, %v675
    %v706 = vlaneseq
    %v707 = vshrl.u32 %v706, 7
    %v708 = vsub.s32 0, %v707
    %v709 = vrot.slane %v694, %v708
    %v710 = vlaneseq
    %v711 = vshrl.u32 %v710, 7
    %v712 = vsub.s32 0, %v711
    %v713 = vrot.slane %v695, %v712
    %v714 = vlaneseq
    %v715 = vshrl.u32 %v714, 7
    %v716 = vsub.s32 0, %v715
    %v717 = vrot.slane %v696, %v716
    %v718 = vlaneseq
    %v719 = vshrl.u32 %v718, 7
    %v720 = vsub.s32 0, %v719
    %v721 = vrot.slane %v697, %v720
    %v730 = vunpack.c.l.b16 %v677
    %v731 = vunpack.c.l.b16 %v678
    %v732 = vunpack.c.l.b16 %v679
    %v733 = vunpack.c.l.b16 %v680
    %v734 = vpack.c.b16 %v731, %v730
    %v735 = vpack.c.b16 %v733, %v732
    %v739 = vsel %vm459, %v698, 0
    %741 = vmatprep.subr.bf16.mxu0 0
    %742 = vmatpush1.bf16.msra.mxu0 0
    %743 = vmatprep.subr.bf16.mxu0 0
    %744 = vmatpush1.bf16.msra.mxu0 0
    %745 = vmatprep.subr.bf16.mxu0 0
    %746 = vmatpush1.bf16.msra.mxu0 0
    %747 = vmatprep.subr.bf16.mxu0 0
    %748 = vmatpush1.bf16.msra.mxu0 0
    %749 = vmatprep.subr.bf16.mxu0 0
    %750 = vmatpush1.bf16.msra.mxu0 0
    %751 = vmatprep.subr.bf16.mxu0 0
    %752 = vmatpush1.bf16.msra.mxu0 0
    %753 = vmatprep.subr.bf16.mxu0 0
    %754 = vmatpush1.bf16.msra.mxu0 %v735
    %755 = vmatprep.subr.bf16.mxu0 0
    %756 = vmatpush1.bf16.msra.mxu0 %v734
    %757 = vmatprep.subr.bf16.mxu0 0
    %758 = vmatpush2.bf16.msra.mxu0 0
    %759 = vmatprep.subr.bf16.mxu0 0
    %760 = vmatpush2.bf16.msra.mxu0 0
    %761 = vmatprep.subr.bf16.mxu0 0
    %762 = vmatpush2.bf16.msra.mxu0 0
    %763 = vmatprep.subr.bf16.mxu0 0
    %764 = vmatpush2.bf16.msra.mxu0 0
    %765 = vmatprep.subr.bf16.mxu0 0
    %766 = vmatpush2.bf16.msra.mxu0 0
    %767 = vmatprep.subr.bf16.mxu0 0
    %768 = vmatpush2.bf16.msra.mxu0 0
    %769 = vmatprep.subr.bf16.mxu0 0
    %770 = vmatpush2.bf16.msra.mxu0 0
    %771 = vmatprep.subr.bf16.mxu0 0
    %772 = vmatpush2.bf16.msra.mxu0 0
    %773 = vmatprep.mubr.bf16.mxu0 0
    %774 = vmatmul.mubr.bf16.gmra.mxu0 %v739
    %v775 = vpop.f32.mrf.mxu0
    %v776 = vadd.f32 %v709, %v775
    %v777 = vpop.f32.mrf.mxu0
    %v778 = vpop.f32.mrf.mxu0
    %v779 = vpop.f32.mrf.mxu0
    %780 = vdwg.mxu0
    %v785 = vunpack.c.l.b16 %v681
    %v786 = vunpack.c.l.b16 %v682
    %v787 = vunpack.c.l.b16 %v683
    %v788 = vunpack.c.l.b16 %v684
    %v789 = vpack.c.b16 %v786, %v785
    %v790 = vpack.c.b16 %v788, %v787
    %v794 = vsel %vm459, %v699, 0
    %796 = vmatprep.subr.bf16.mxu0 0
    %797 = vmatpush1.bf16.msra.mxu0 0
    %798 = vmatprep.subr.bf16.mxu0 0
    %799 = vmatpush1.bf16.msra.mxu0 0
    %800 = vmatprep.subr.bf16.mxu0 0
    %801 = vmatpush1.bf16.msra.mxu0 0
    %802 = vmatprep.subr.bf16.mxu0 0
    %803 = vmatpush1.bf16.msra.mxu0 0
    %804 = vmatprep.subr.bf16.mxu0 0
    %805 = vmatpush1.bf16.msra.mxu0 0
    %806 = vmatprep.subr.bf16.mxu0 0
    %807 = vmatpush1.bf16.msra.mxu0 0
    %808 = vmatprep.subr.bf16.mxu0 0
    %809 = vmatpush1.bf16.msra.mxu0 %v790
    %810 = vmatprep.subr.bf16.mxu0 0
    %811 = vmatpush1.bf16.msra.mxu0 %v789
    %812 = vmatprep.subr.bf16.mxu0 0
    %813 = vmatpush2.bf16.msra.mxu0 0
    %814 = vmatprep.subr.bf16.mxu0 0
    %815 = vmatpush2.bf16.msra.mxu0 0
    %816 = vmatprep.subr.bf16.mxu0 0
    %817 = vmatpush2.bf16.msra.mxu0 0
    %818 = vmatprep.subr.bf16.mxu0 0
    %819 = vmatpush2.bf16.msra.mxu0 0
    %820 = vmatprep.subr.bf16.mxu0 0
    %821 = vmatpush2.bf16.msra.mxu0 0
    %822 = vmatprep.subr.bf16.mxu0 0
    %823 = vmatpush2.bf16.msra.mxu0 0
    %824 = vmatprep.subr.bf16.mxu0 0
    %825 = vmatpush2.bf16.msra.mxu0 0
    %826 = vmatprep.subr.bf16.mxu0 0
    %827 = vmatpush2.bf16.msra.mxu0 0
    %828 = vmatprep.mubr.bf16.mxu0 0
    %829 = vmatmul.mubr.bf16.gmra.mxu0 %v794
    %v830 = vpop.f32.mrf.mxu0
    %v831 = vadd.f32 %v713, %v830
    %v832 = vpop.f32.mrf.mxu0
    %v833 = vpop.f32.mrf.mxu0
    %v834 = vpop.f32.mrf.mxu0
    %835 = vdwg.mxu0
    %v840 = vunpack.c.l.b16 %v685
    %v841 = vunpack.c.l.b16 %v686
    %v842 = vunpack.c.l.b16 %v687
    %v843 = vunpack.c.l.b16 %v688
    %v844 = vpack.c.b16 %v841, %v840
    %v845 = vpack.c.b16 %v843, %v842
    %v849 = vsel %vm459, %v700, 0
    %851 = vmatprep.subr.bf16.mxu0 0
    %852 = vmatpush1.bf16.msra.mxu0 0
    %853 = vmatprep.subr.bf16.mxu0 0
    %854 = vmatpush1.bf16.msra.mxu0 0
    %855 = vmatprep.subr.bf16.mxu0 0
    %856 = vmatpush1.bf16.msra.mxu0 0
    %857 = vmatprep.subr.bf16.mxu0 0
    %858 = vmatpush1.bf16.msra.mxu0 0
    %859 = vmatprep.subr.bf16.mxu0 0
    %860 = vmatpush1.bf16.msra.mxu0 0
    %861 = vmatprep.subr.bf16.mxu0 0
    %862 = vmatpush1.bf16.msra.mxu0 0
    %863 = vmatprep.subr.bf16.mxu0 0
    %864 = vmatpush1.bf16.msra.mxu0 %v845
    %865 = vmatprep.subr.bf16.mxu0 0
    %866 = vmatpush1.bf16.msra.mxu0 %v844
    %867 = vmatprep.subr.bf16.mxu0 0
    %868 = vmatpush2.bf16.msra.mxu0 0
    %869 = vmatprep.subr.bf16.mxu0 0
    %870 = vmatpush2.bf16.msra.mxu0 0
    %871 = vmatprep.subr.bf16.mxu0 0
    %872 = vmatpush2.bf16.msra.mxu0 0
    %873 = vmatprep.subr.bf16.mxu0 0
    %874 = vmatpush2.bf16.msra.mxu0 0
    %875 = vmatprep.subr.bf16.mxu0 0
    %876 = vmatpush2.bf16.msra.mxu0 0
    %877 = vmatprep.subr.bf16.mxu0 0
    %878 = vmatpush2.bf16.msra.mxu0 0
    %879 = vmatprep.subr.bf16.mxu0 0
    %880 = vmatpush2.bf16.msra.mxu0 0
    %881 = vmatprep.subr.bf16.mxu0 0
    %882 = vmatpush2.bf16.msra.mxu0 0
    %883 = vmatprep.mubr.bf16.mxu0 0
    %884 = vmatmul.mubr.bf16.gmra.mxu0 %v849
    %v885 = vpop.f32.mrf.mxu0
    %v886 = vadd.f32 %v717, %v885
    %v887 = vpop.f32.mrf.mxu0
    %v888 = vpop.f32.mrf.mxu0
    %v889 = vpop.f32.mrf.mxu0
    %890 = vdwg.mxu0
    %v895 = vunpack.c.l.b16 %v689
    %v896 = vunpack.c.l.b16 %v690
    %v897 = vunpack.c.l.b16 %v691
    %v898 = vunpack.c.l.b16 %v692
    %v899 = vpack.c.b16 %v896, %v895
    %v900 = vpack.c.b16 %v898, %v897
    %v904 = vsel %vm459, %v701, 0
    %906 = vmatprep.subr.bf16.mxu0 0
    %907 = vmatpush1.bf16.msra.mxu0 0
    %908 = vmatprep.subr.bf16.mxu0 0
    %909 = vmatpush1.bf16.msra.mxu0 0
    %910 = vmatprep.subr.bf16.mxu0 0
    %911 = vmatpush1.bf16.msra.mxu0 0
    %912 = vmatprep.subr.bf16.mxu0 0
    %913 = vmatpush1.bf16.msra.mxu0 0
    %914 = vmatprep.subr.bf16.mxu0 0
    %915 = vmatpush1.bf16.msra.mxu0 0
    %916 = vmatprep.subr.bf16.mxu0 0
    %917 = vmatpush1.bf16.msra.mxu0 0
    %918 = vmatprep.subr.bf16.mxu0 0
    %919 = vmatpush1.bf16.msra.mxu0 %v900
    %920 = vmatprep.subr.bf16.mxu0 0
    %921 = vmatpush1.bf16.msra.mxu0 %v899
    %922 = vmatprep.subr.bf16.mxu0 0
    %923 = vmatpush2.bf16.msra.mxu0 0
    %924 = vmatprep.subr.bf16.mxu0 0
    %925 = vmatpush2.bf16.msra.mxu0 0
    %926 = vmatprep.subr.bf16.mxu0 0
    %927 = vmatpush2.bf16.msra.mxu0 0
    %928 = vmatprep.subr.bf16.mxu0 0
    %929 = vmatpush2.bf16.msra.mxu0 0
    %930 = vmatprep.subr.bf16.mxu0 0
    %931 = vmatpush2.bf16.msra.mxu0 0
    %932 = vmatprep.subr.bf16.mxu0 0
    %933 = vmatpush2.bf16.msra.mxu0 0
    %934 = vmatprep.subr.bf16.mxu0 0
    %935 = vmatpush2.bf16.msra.mxu0 0
    %936 = vmatprep.subr.bf16.mxu0 0
    %937 = vmatpush2.bf16.msra.mxu0 0
    %938 = vmatprep.mubr.bf16.mxu0 0
    %939 = vmatmul.mubr.bf16.gmra.mxu0 %v904
    %v940 = vpop.f32.mrf.mxu0
    %v941 = vadd.f32 %v721, %v940
    %v942 = vpop.f32.mrf.mxu0
    %v943 = vpop.f32.mrf.mxu0
    %v944 = vpop.f32.mrf.mxu0
    %945 = vdwg.mxu0
    %v946 = vmax.f32 %v776, 0.0
    %v947 = vmax.f32 %v831, 0.0
    %v948 = vmax.f32 %v886, 0.0
    %v949 = vmax.f32 %v941, 0.0
    %v950 = vld [vmem:[#allocation2] sm:$0xf]
    %v951 = vld [vmem:[#allocation2 + $0x4] sm:$0xf]
    %v952 = vld [vmem:[#allocation2 + $0x8] sm:$0xf]
    %v953 = vld [vmem:[#allocation2 + $0xc] sm:$0xf]
    %v954 = vpack.c.bf16 %v668, %v668
    %v955 = vpack.c.bf16 %v669, %v669
    %v956 = vpack.c.bf16 %v670, %v670
    %v957 = vpack.c.bf16 %v671, %v671
    %v959 = vsel %vm459, %v950, 0
    %v962 = vsel %vm459, %v954, 0
    %964 = vmatprep.subr.bf16.mxu0 0
    %965 = vmatpush1.bf16.xpose.msra.mxu0 0
    %966 = vmatprep.subr.bf16.mxu0 0
    %967 = vmatpush1.bf16.xpose.msra.mxu0 0
    %968 = vmatprep.subr.bf16.mxu0 0
    %969 = vmatpush1.bf16.xpose.msra.mxu0 0
    %970 = vmatprep.subr.bf16.mxu0 0
    %971 = vmatpush1.bf16.xpose.msra.mxu0 0
    %972 = vmatprep.subr.bf16.mxu0 0
    %973 = vmatpush1.bf16.xpose.msra.mxu0 0
    %974 = vmatprep.subr.bf16.mxu0 0
    %975 = vmatpush1.bf16.xpose.msra.mxu0 0
    %976 = vmatprep.subr.bf16.mxu0 0
    %977 = vmatpush1.bf16.xpose.msra.mxu0 0
    %978 = vmatprep.subr.bf16.mxu0 0
    %979 = vmatpush1.bf16.xpose.msra.mxu0 %v962
    %980 = vmatprep.subr.bf16.mxu0 0
    %981 = vmatpush2.bf16.xpose.msra.mxu0 0
    %982 = vmatprep.subr.bf16.mxu0 0
    %983 = vmatpush2.bf16.xpose.msra.mxu0 0
    %984 = vmatprep.subr.bf16.mxu0 0
    %985 = vmatpush2.bf16.xpose.msra.mxu0 0
    %986 = vmatprep.subr.bf16.mxu0 0
    %987 = vmatpush2.bf16.xpose.msra.mxu0 0
    %988 = vmatprep.subr.bf16.mxu0 0
    %989 = vmatpush2.bf16.xpose.msra.mxu0 0
    %990 = vmatprep.subr.bf16.mxu0 0
    %991 = vmatpush2.bf16.xpose.msra.mxu0 0
    %992 = vmatprep.subr.bf16.mxu0 0
    %993 = vmatpush2.bf16.xpose.msra.mxu0 0
    %994 = vmatprep.subr.bf16.mxu0 0
    %995 = vmatpush2.bf16.xpose.msra.mxu0 0
    %996 = vmatprep.mubr.bf16.mxu0 0
    %997 = vmatmul.mubr.bf16.gmra.mxu0 %v959
    %v998 = vpop.f32.mrf.mxu0
    %v999 = vadd.f32 0.0, %v998
    %v1000 = vpop.f32.mrf.mxu0
    %v1001 = vpop.f32.mrf.mxu0
    %v1002 = vpop.f32.mrf.mxu0
    %1003 = vdwg.mxu0
    %v1005 = vsel %vm459, %v951, 0
    %v1008 = vsel %vm459, %v955, 0
    %1010 = vmatprep.subr.bf16.mxu0 0
    %1011 = vmatpush1.bf16.xpose.msra.mxu0 0
    %1012 = vmatprep.subr.bf16.mxu0 0
    %1013 = vmatpush1.bf16.xpose.msra.mxu0 0
    %1014 = vmatprep.subr.bf16.mxu0 0
    %1015 = vmatpush1.bf16.xpose.msra.mxu0 0
    %1016 = vmatprep.subr.bf16.mxu0 0
    %1017 = vmatpush1.bf16.xpose.msra.mxu0 0
    %1018 = vmatprep.subr.bf16.mxu0 0
    %1019 = vmatpush1.bf16.xpose.msra.mxu0 0
    %1020 = vmatprep.subr.bf16.mxu0 0
    %1021 = vmatpush1.bf16.xpose.msra.mxu0 0
    %1022 = vmatprep.subr.bf16.mxu0 0
    %1023 = vmatpush1.bf16.xpose.msra.mxu0 0
    %1024 = vmatprep.subr.bf16.mxu0 0
    %1025 = vmatpush1.bf16.xpose.msra.mxu0 %v1008
    %1026 = vmatprep.subr.bf16.mxu0 0
    %1027 = vmatpush2.bf16.xpose.msra.mxu0 0
    %1028 = vmatprep.subr.bf16.mxu0 0
    %1029 = vmatpush2.bf16.xpose.msra.mxu0 0
    %1030 = vmatprep.subr.bf16.mxu0 0
    %1031 = vmatpush2.bf16.xpose.msra.mxu0 0
    %1032 = vmatprep.subr.bf16.mxu0 0
    %1033 = vmatpush2.bf16.xpose.msra.mxu0 0
    %1034 = vmatprep.subr.bf16.mxu0 0
    %1035 = vmatpush2.bf16.xpose.msra.mxu0 0
    %1036 = vmatprep.subr.bf16.mxu0 0
    %1037 = vmatpush2.bf16.xpose.msra.mxu0 0
    %1038 = vmatprep.subr.bf16.mxu0 0
    %1039 = vmatpush2.bf16.xpose.msra.mxu0 0
    %1040 = vmatprep.subr.bf16.mxu0 0
    %1041 = vmatpush2.bf16.xpose.msra.mxu0 0
    %1042 = vmatprep.mubr.bf16.mxu0 0
    %1043 = vmatmul.mubr.bf16.gmra.mxu0 %v1005
    %v1044 = vpop.f32.mrf.mxu0
    %v1045 = vadd.f32 0.0, %v1044
    %v1046 = vpop.f32.mrf.mxu0
    %v1047 = vpop.f32.mrf.mxu0
    %v1048 = vpop.f32.mrf.mxu0
    %1049 = vdwg.mxu0
    %v1051 = vsel %vm459, %v952, 0
    %v1054 = vsel %vm459, %v956, 0
    %1056 = vmatprep.subr.bf16.mxu0 0
    %1057 = vmatpush1.bf16.xpose.msra.mxu0 0
    %1058 = vmatprep.subr.bf16.mxu0 0
    %1059 = vmatpush1.bf16.xpose.msra.mxu0 0
    %1060 = vmatprep.subr.bf16.mxu0 0
    %1061 = vmatpush1.bf16.xpose.msra.mxu0 0
    %1062 = vmatprep.subr.bf16.mxu0 0
    %1063 = vmatpush1.bf16.xpose.msra.mxu0 0
    %1064 = vmatprep.subr.bf16.mxu0 0
    %1065 = vmatpush1.bf16.xpose.msra.mxu0 0
    %1066 = vmatprep.subr.bf16.mxu0 0
    %1067 = vmatpush1.bf16.xpose.msra.mxu0 0
    %1068 = vmatprep.subr.bf16.mxu0 0
    %1069 = vmatpush1.bf16.xpose.msra.mxu0 0
    %1070 = vmatprep.subr.bf16.mxu0 0
    %1071 = vmatpush1.bf16.xpose.msra.mxu0 %v1054
    %1072 = vmatprep.subr.bf16.mxu0 0
    %1073 = vmatpush2.bf16.xpose.msra.mxu0 0
    %1074 = vmatprep.subr.bf16.mxu0 0
    %1075 = vmatpush2.bf16.xpose.msra.mxu0 0
    %1076 = vmatprep.subr.bf16.mxu0 0
    %1077 = vmatpush2.bf16.xpose.msra.mxu0 0
    %1078 = vmatprep.subr.bf16.mxu0 0
    %1079 = vmatpush2.bf16.xpose.msra.mxu0 0
    %1080 = vmatprep.subr.bf16.mxu0 0
    %1081 = vmatpush2.bf16.xpose.msra.mxu0 0
    %1082 = vmatprep.subr.bf16.mxu0 0
    %1083 = vmatpush2.bf16.xpose.msra.mxu0 0
    %1084 = vmatprep.subr.bf16.mxu0 0
    %1085 = vmatpush2.bf16.xpose.msra.mxu0 0
    %1086 = vmatprep.subr.bf16.mxu0 0
    %1087 = vmatpush2.bf16.xpose.msra.mxu0 0
    %1088 = vmatprep.mubr.bf16.mxu0 0
    %1089 = vmatmul.mubr.bf16.gmra.mxu0 %v1051
    %v1090 = vpop.f32.mrf.mxu0
    %v1091 = vadd.f32 0.0, %v1090
    %v1092 = vpop.f32.mrf.mxu0
    %v1093 = vpop.f32.mrf.mxu0
    %v1094 = vpop.f32.mrf.mxu0
    %1095 = vdwg.mxu0
    %v1097 = vsel %vm459, %v953, 0
    %v1100 = vsel %vm459, %v957, 0
    %1102 = vmatprep.subr.bf16.mxu0 0
    %1103 = vmatpush1.bf16.xpose.msra.mxu0 0
    %1104 = vmatprep.subr.bf16.mxu0 0
    %1105 = vmatpush1.bf16.xpose.msra.mxu0 0
    %1106 = vmatprep.subr.bf16.mxu0 0
    %1107 = vmatpush1.bf16.xpose.msra.mxu0 0
    %1108 = vmatprep.subr.bf16.mxu0 0
    %1109 = vmatpush1.bf16.xpose.msra.mxu0 0
    %1110 = vmatprep.subr.bf16.mxu0 0
    %1111 = vmatpush1.bf16.xpose.msra.mxu0 0
    %1112 = vmatprep.subr.bf16.mxu0 0
    %1113 = vmatpush1.bf16.xpose.msra.mxu0 0
    %1114 = vmatprep.subr.bf16.mxu0 0
    %1115 = vmatpush1.bf16.xpose.msra.mxu0 0
    %1116 = vmatprep.subr.bf16.mxu0 0
    %1117 = vmatpush1.bf16.xpose.msra.mxu0 %v1100
    %1118 = vmatprep.subr.bf16.mxu0 0
    %1119 = vmatpush2.bf16.xpose.msra.mxu0 0
    %1120 = vmatprep.subr.bf16.mxu0 0
    %1121 = vmatpush2.bf16.xpose.msra.mxu0 0
    %1122 = vmatprep.subr.bf16.mxu0 0
    %1123 = vmatpush2.bf16.xpose.msra.mxu0 0
    %1124 = vmatprep.subr.bf16.mxu0 0
    %1125 = vmatpush2.bf16.xpose.msra.mxu0 0
    %1126 = vmatprep.subr.bf16.mxu0 0
    %1127 = vmatpush2.bf16.xpose.msra.mxu0 0
    %1128 = vmatprep.subr.bf16.mxu0 0
    %1129 = vmatpush2.bf16.xpose.msra.mxu0 0
    %1130 = vmatprep.subr.bf16.mxu0 0
    %1131 = vmatpush2.bf16.xpose.msra.mxu0 0
    %1132 = vmatprep.subr.bf16.mxu0 0
    %1133 = vmatpush2.bf16.xpose.msra.mxu0 0
    %1134 = vmatprep.mubr.bf16.mxu0 0
    %1135 = vmatmul.mubr.bf16.gmra.mxu0 %v1097
    %v1136 = vpop.f32.mrf.mxu0
    %v1137 = vadd.f32 0.0, %v1136
    %v1138 = vpop.f32.mrf.mxu0
    %v1139 = vpop.f32.mrf.mxu0
    %v1140 = vpop.f32.mrf.mxu0
    %1141 = vdwg.mxu0
    %v1142 = vld [vmem:[#allocation3] sm:$0xff]
    %v1143 = vld [vmem:[#allocation3 + $0x8] sm:$0xff]
    %v1144 = vld [vmem:[#allocation3 + $0x10] sm:$0xff]
    %v1145 = vld [vmem:[#allocation3 + $0x18] sm:$0xff]
    %vm1146 = vcmask 64512
    %v1147 = vsel %vm1146, %v999, -inf
    %1148 = vmax.xlane.f32.xlu0 %v1147
    %v1149 = vpop.xlane.xlu0 %1148
    %v1150 = vsel %vm1146, %v1045, -inf
    %1151 = vmax.xlane.f32.xlu0 %v1150
    %v1152 = vpop.xlane.xlu0 %1151
    %v1153 = vsel %vm1146, %v1091, -inf
    %1154 = vmax.xlane.f32.xlu0 %v1153
    %v1155 = vpop.xlane.xlu0 %1154
    %v1156 = vsel %vm1146, %v1137, -inf
    %1157 = vmax.xlane.f32.xlu0 %v1156
    %v1158 = vpop.xlane.xlu0 %1157
    %v1159 = vmax.f32 %v1142, %v1149
    %v1160 = vmax.f32 %v1143, %v1152
    %v1161 = vmax.f32 %v1144, %v1155
    %v1162 = vmax.f32 %v1145, %v1158
    %v1163 = vsub.f32 %v1142, %v1159
    %v1164 = vsub.f32 %v1143, %v1160
    %v1165 = vsub.f32 %v1144, %v1161
    %v1166 = vsub.f32 %v1145, %v1162
    %v1167 = vmul.f32 %v1163, 1.442695
    %v1168 = vpow.pop %v1167
    %v1169 = vmul.f32 %v1164, 1.442695
    %v1170 = vpow.pop %v1169
    %v1171 = vmul.f32 %v1165, 1.442695
    %v1172 = vpow.pop %v1171
    %v1173 = vmul.f32 %v1166, 1.442695
    %v1174 = vpow.pop %v1173
    %1176 = vset.pattern.permute.xlu0 0
    %1177 = vperm.xlu0 %1176, %v1159
    %v1178 = vpop.permute.xlu0 %1177
    %1181 = vset.pattern.permute.xlu0 0
    %1182 = vperm.xlu0 %1181, %v1160
    %v1183 = vpop.permute.xlu0 %1182
    %1186 = vset.pattern.permute.xlu0 0
    %1187 = vperm.xlu0 %1186, %v1161
    %v1188 = vpop.permute.xlu0 %1187
    %1191 = vset.pattern.permute.xlu0 0
    %1192 = vperm.xlu0 %1191, %v1162
    %v1193 = vpop.permute.xlu0 %1192
    %v1195 = vsub.f32 %v999, %v1178
    %v1196 = vsub.f32 %v1045, %v1183
    %v1197 = vsub.f32 %v1091, %v1188
    %v1198 = vsub.f32 %v1137, %v1193
    %v1199 = vmul.f32 %v1195, 1.442695
    %v1200 = vpow.pop %v1199
    %v1201 = vmul.f32 %v1196, 1.442695
    %v1202 = vpow.pop %v1201
    %v1203 = vmul.f32 %v1197, 1.442695
    %v1204 = vpow.pop %v1203
    %v1205 = vmul.f32 %v1198, 1.442695
    %v1206 = vpow.pop %v1205
    %v1207 = vld [vmem:[#allocation4] sm:$0xff]
    %v1208 = vld [vmem:[#allocation4 + $0x8] sm:$0xff]
    %v1209 = vld [vmem:[#allocation4 + $0x10] sm:$0xff]
    %v1210 = vld [vmem:[#allocation4 + $0x18] sm:$0xff]
    %v1211 = vmul.f32 %v1168, %v1207
    %v1212 = vmul.f32 %v1170, %v1208
    %v1213 = vmul.f32 %v1172, %v1209
    %v1214 = vmul.f32 %v1174, %v1210
    %v1215 = vsel %vm1146, %v1200, 0.0
    %1216 = vadd.xlane.f32.xlu0 %v1215
    %v1217 = vpop.xlane.xlu0 %1216
    %v1218 = vsel %vm1146, %v1202, 0.0
    %1219 = vadd.xlane.f32.xlu0 %v1218
    %v1220 = vpop.xlane.xlu0 %1219
    %v1221 = vsel %vm1146, %v1204, 0.0
    %1222 = vadd.xlane.f32.xlu0 %v1221
    %v1223 = vpop.xlane.xlu0 %1222
    %v1224 = vsel %vm1146, %v1206, 0.0
    %1225 = vadd.xlane.f32.xlu0 %v1224
    %v1226 = vpop.xlane.xlu0 %1225
    %v1227 = vadd.f32 %v1211, %v1217
    %v1228 = vadd.f32 %v1212, %v1220
    %v1229 = vadd.f32 %v1213, %v1223
    %v1230 = vadd.f32 %v1214, %v1226
    %vm1231 = vcmask 7168
    %1232 = vst.msk [vmem:[#allocation4] sm:$0xff] %vm1231, %v1227
    %1233 = vst.msk [vmem:[#allocation4 + $0x8] sm:$0xff] %vm1231, %v1228
    %1234 = vst.msk [vmem:[#allocation4 + $0x10] sm:$0xff] %vm1231, %v1229
    %1235 = vst.msk [vmem:[#allocation4 + $0x18] sm:$0xff] %vm1231, %v1230
    %v1236 = vld [vmem:[#allocation5] sm:$0xff]
    %v1237 = vld [vmem:[#allocation5 + $0x8] sm:$0xff]
    %v1238 = vld [vmem:[#allocation5 + $0x10] sm:$0xff]
    %v1239 = vld [vmem:[#allocation5 + $0x18] sm:$0xff]
    %1241 = vset.pattern.permute.xlu0 0
    %1242 = vperm.xlu0 %1241, %v1168
    %v1243 = vpop.permute.xlu0 %1242
    %1246 = vset.pattern.permute.xlu0 0
    %1247 = vperm.xlu0 %1246, %v1170
    %v1248 = vpop.permute.xlu0 %1247
    %1251 = vset.pattern.permute.xlu0 0
    %1252 = vperm.xlu0 %1251, %v1172
    %v1253 = vpop.permute.xlu0 %1252
    %1256 = vset.pattern.permute.xlu0 0
    %1257 = vperm.xlu0 %1256, %v1174
    %v1258 = vpop.permute.xlu0 %1257
    %v1260 = vmul.f32 %v1243, %v1236
    %v1261 = vmul.f32 %v1248, %v1237
    %v1262 = vmul.f32 %v1253, %v1238
    %v1263 = vmul.f32 %v1258, %v1239
    %v1264 = vpack.c.bf16 %v1200, %v1200
    %v1265 = vpack.c.bf16 %v1202, %v1202
    %v1266 = vpack.c.bf16 %v1204, %v1204
    %v1267 = vpack.c.bf16 %v1206, %v1206
    %v1268 = vpack.c.bf16 %v946, %v946
    %v1269 = vpack.c.bf16 %v947, %v947
    %v1270 = vpack.c.bf16 %v948, %v948
    %v1271 = vpack.c.bf16 %v949, %v949
    %v1273 = vsel %vm1146, %v1264, 0
    %vm1275 = vcmask 1043456
    %v1277 = vsel %vm1275, %v1268, 0
    %1279 = vmatprep.subr.bf16.mxu0 0
    %1280 = vmatpush1.bf16.msra.mxu0 0
    %1281 = vmatprep.subr.bf16.mxu0 0
    %1282 = vmatpush1.bf16.msra.mxu0 0
    %1283 = vmatprep.subr.bf16.mxu0 0
    %1284 = vmatpush1.bf16.msra.mxu0 0
    %1285 = vmatprep.subr.bf16.mxu0 0
    %1286 = vmatpush1.bf16.msra.mxu0 0
    %1287 = vmatprep.subr.bf16.mxu0 0
    %1288 = vmatpush1.bf16.msra.mxu0 0
    %1289 = vmatprep.subr.bf16.mxu0 0
    %1290 = vmatpush1.bf16.msra.mxu0 0
    %1291 = vmatprep.subr.bf16.mxu0 0
    %1292 = vmatpush1.bf16.msra.mxu0 0
    %1293 = vmatprep.subr.bf16.mxu0 0
    %1294 = vmatpush1.bf16.msra.mxu0 %v1277
    %1295 = vmatprep.subr.bf16.mxu0 0
    %1296 = vmatpush2.bf16.msra.mxu0 0
    %1297 = vmatprep.subr.bf16.mxu0 0
    %1298 = vmatpush2.bf16.msra.mxu0 0
    %1299 = vmatprep.subr.bf16.mxu0 0
    %1300 = vmatpush2.bf16.msra.mxu0 0
    %1301 = vmatprep.subr.bf16.mxu0 0
    %1302 = vmatpush2.bf16.msra.mxu0 0
    %1303 = vmatprep.subr.bf16.mxu0 0
    %1304 = vmatpush2.bf16.msra.mxu0 0
    %1305 = vmatprep.subr.bf16.mxu0 0
    %1306 = vmatpush2.bf16.msra.mxu0 0
    %1307 = vmatprep.subr.bf16.mxu0 0
    %1308 = vmatpush2.bf16.msra.mxu0 0
    %1309 = vmatprep.subr.bf16.mxu0 0
    %1310 = vmatpush2.bf16.msra.mxu0 0
    %1311 = vmatprep.mubr.bf16.mxu0 0
    %1312 = vmatmul.mubr.bf16.gmra.mxu0 %v1273
    %v1313 = vpop.f32.mrf.mxu0
    %v1314 = vadd.f32 0.0, %v1313
    %v1315 = vpop.f32.mrf.mxu0
    %v1316 = vpop.f32.mrf.mxu0
    %v1317 = vpop.f32.mrf.mxu0
    %1318 = vdwg.mxu0
    %v1320 = vsel %vm1146, %v1265, 0
    %v1323 = vsel %vm1275, %v1269, 0
    %1325 = vmatprep.subr.bf16.mxu0 0
    %1326 = vmatpush1.bf16.msra.mxu0 0
    %1327 = vmatprep.subr.bf16.mxu0 0
    %1328 = vmatpush1.bf16.msra.mxu0 0
    %1329 = vmatprep.subr.bf16.mxu0 0
    %1330 = vmatpush1.bf16.msra.mxu0 0
    %1331 = vmatprep.subr.bf16.mxu0 0
    %1332 = vmatpush1.bf16.msra.mxu0 0
    %1333 = vmatprep.subr.bf16.mxu0 0
    %1334 = vmatpush1.bf16.msra.mxu0 0
    %1335 = vmatprep.subr.bf16.mxu0 0
    %1336 = vmatpush1.bf16.msra.mxu0 0
    %1337 = vmatprep.subr.bf16.mxu0 0
    %1338 = vmatpush1.bf16.msra.mxu0 0
    %1339 = vmatprep.subr.bf16.mxu0 0
    %1340 = vmatpush1.bf16.msra.mxu0 %v1323
    %1341 = vmatprep.subr.bf16.mxu0 0
    %1342 = vmatpush2.bf16.msra.mxu0 0
    %1343 = vmatprep.subr.bf16.mxu0 0
    %1344 = vmatpush2.bf16.msra.mxu0 0
    %1345 = vmatprep.subr.bf16.mxu0 0
    %1346 = vmatpush2.bf16.msra.mxu0 0
    %1347 = vmatprep.subr.bf16.mxu0 0
    %1348 = vmatpush2.bf16.msra.mxu0 0
    %1349 = vmatprep.subr.bf16.mxu0 0
    %1350 = vmatpush2.bf16.msra.mxu0 0
    %1351 = vmatprep.subr.bf16.mxu0 0
    %1352 = vmatpush2.bf16.msra.mxu0 0
    %1353 = vmatprep.subr.bf16.mxu0 0
    %1354 = vmatpush2.bf16.msra.mxu0 0
    %1355 = vmatprep.subr.bf16.mxu0 0
    %1356 = vmatpush2.bf16.msra.mxu0 0
    %1357 = vmatprep.mubr.bf16.mxu0 0
    %1358 = vmatmul.mubr.bf16.gmra.mxu0 %v1320
    %v1359 = vpop.f32.mrf.mxu0
    %v1360 = vadd.f32 0.0, %v1359
    %v1361 = vpop.f32.mrf.mxu0
    %v1362 = vpop.f32.mrf.mxu0
    %v1363 = vpop.f32.mrf.mxu0
    %1364 = vdwg.mxu0
    %v1366 = vsel %vm1146, %v1266, 0
    %v1369 = vsel %vm1275, %v1270, 0
    %1371 = vmatprep.subr.bf16.mxu0 0
    %1372 = vmatpush1.bf16.msra.mxu0 0
    %1373 = vmatprep.subr.bf16.mxu0 0
    %1374 = vmatpush1.bf16.msra.mxu0 0
    %1375 = vmatprep.subr.bf16.mxu0 0
    %1376 = vmatpush1.bf16.msra.mxu0 0
    %1377 = vmatprep.subr.bf16.mxu0 0
    %1378 = vmatpush1.bf16.msra.mxu0 0
    %1379 = vmatprep.subr.bf16.mxu0 0
    %1380 = vmatpush1.bf16.msra.mxu0 0
    %1381 = vmatprep.subr.bf16.mxu0 0
    %1382 = vmatpush1.bf16.msra.mxu0 0
    %1383 = vmatprep.subr.bf16.mxu0 0
    %1384 = vmatpush1.bf16.msra.mxu0 0
    %1385 = vmatprep.subr.bf16.mxu0 0
    %1386 = vmatpush1.bf16.msra.mxu0 %v1369
    %1387 = vmatprep.subr.bf16.mxu0 0
    %1388 = vmatpush2.bf16.msra.mxu0 0
    %1389 = vmatprep.subr.bf16.mxu0 0
    %1390 = vmatpush2.bf16.msra.mxu0 0
    %1391 = vmatprep.subr.bf16.mxu0 0
    %1392 = vmatpush2.bf16.msra.mxu0 0
    %1393 = vmatprep.subr.bf16.mxu0 0
    %1394 = vmatpush2.bf16.msra.mxu0 0
    %1395 = vmatprep.subr.bf16.mxu0 0
    %1396 = vmatpush2.bf16.msra.mxu0 0
    %1397 = vmatprep.subr.bf16.mxu0 0
    %1398 = vmatpush2.bf16.msra.mxu0 0
    %1399 = vmatprep.subr.bf16.mxu0 0
    %1400 = vmatpush2.bf16.msra.mxu0 0
    %1401 = vmatprep.subr.bf16.mxu0 0
    %1402 = vmatpush2.bf16.msra.mxu0 0
    %1403 = vmatprep.mubr.bf16.mxu0 0
    %1404 = vmatmul.mubr.bf16.gmra.mxu0 %v1366
    %v1405 = vpop.f32.mrf.mxu0
    %v1406 = vadd.f32 0.0, %v1405
    %v1407 = vpop.f32.mrf.mxu0
    %v1408 = vpop.f32.mrf.mxu0
    %v1409 = vpop.f32.mrf.mxu0
    %1410 = vdwg.mxu0
    %v1412 = vsel %vm1146, %v1267, 0
    %v1415 = vsel %vm1275, %v1271, 0
    %1417 = vmatprep.subr.bf16.mxu0 0
    %1418 = vmatpush1.bf16.msra.mxu0 0
    %1419 = vmatprep.subr.bf16.mxu0 0
    %1420 = vmatpush1.bf16.msra.mxu0 0
    %1421 = vmatprep.subr.bf16.mxu0 0
    %1422 = vmatpush1.bf16.msra.mxu0 0
    %1423 = vmatprep.subr.bf16.mxu0 0
    %1424 = vmatpush1.bf16.msra.mxu0 0
    %1425 = vmatprep.subr.bf16.mxu0 0
    %1426 = vmatpush1.bf16.msra.mxu0 0
    %1427 = vmatprep.subr.bf16.mxu0 0
    %1428 = vmatpush1.bf16.msra.mxu0 0
    %1429 = vmatprep.subr.bf16.mxu0 0
    %1430 = vmatpush1.bf16.msra.mxu0 0
    %1431 = vmatprep.subr.bf16.mxu0 0
    %1432 = vmatpush1.bf16.msra.mxu0 %v1415
    %1433 = vmatprep.subr.bf16.mxu0 0
    %1434 = vmatpush2.bf16.msra.mxu0 0
    %1435 = vmatprep.subr.bf16.mxu0 0
    %1436 = vmatpush2.bf16.msra.mxu0 0
    %1437 = vmatprep.subr.bf16.mxu0 0
    %1438 = vmatpush2.bf16.msra.mxu0 0
    %1439 = vmatprep.subr.bf16.mxu0 0
    %1440 = vmatpush2.bf16.msra.mxu0 0
    %1441 = vmatprep.subr.bf16.mxu0 0
    %1442 = vmatpush2.bf16.msra.mxu0 0
    %1443 = vmatprep.subr.bf16.mxu0 0
    %1444 = vmatpush2.bf16.msra.mxu0 0
    %1445 = vmatprep.subr.bf16.mxu0 0
    %1446 = vmatpush2.bf16.msra.mxu0 0
    %1447 = vmatprep.subr.bf16.mxu0 0
    %1448 = vmatpush2.bf16.msra.mxu0 0
    %1449 = vmatprep.mubr.bf16.mxu0 0
    %1450 = vmatmul.mubr.bf16.gmra.mxu0 %v1412
    %v1451 = vpop.f32.mrf.mxu0
    %v1452 = vadd.f32 0.0, %v1451
    %v1453 = vpop.f32.mrf.mxu0
    %v1454 = vpop.f32.mrf.mxu0
    %v1455 = vpop.f32.mrf.mxu0
    %1456 = vdwg.mxu0
    %v1457 = vadd.f32 %v1260, %v1314
    %v1458 = vadd.f32 %v1261, %v1360
    %v1459 = vadd.f32 %v1262, %v1406
    %v1460 = vadd.f32 %v1263, %v1452
    %1461 = vst.msk [vmem:[#allocation5] sm:$0xff] %vm459, %v1457
    %1462 = vst.msk [vmem:[#allocation5 + $0x8] sm:$0xff] %vm459, %v1458
    %1463 = vst.msk [vmem:[#allocation5 + $0x10] sm:$0xff] %vm459, %v1459
    %1464 = vst.msk [vmem:[#allocation5 + $0x18] sm:$0xff] %vm459, %v1460
    %1465 = vst.msk [vmem:[#allocation3] sm:$0xff] %vm1231, %v1159
    %1466 = vst.msk [vmem:[#allocation3 + $0x8] sm:$0xff] %vm1231, %v1160
    %1467 = vst.msk [vmem:[#allocation3 + $0x10] sm:$0xff] %vm1231, %v1161
    %1468 = vst.msk [vmem:[#allocation3 + $0x18] sm:$0xff] %vm1231, %v1162
    // Predicated region
    $region46: #{tpu_custom_call.1} parent=1 // pred_check
      %p1469 = pneg %p90
    $region47: #{tpu_custom_call.1} parent=1 // pred_check_branch
      %1471 = sbr.rel (%p1469) target = $region49
    $region48: #{tpu_custom_call.1} parent=1 // pred_region
      %v1472 = vld [vmem:[#allocation5] sm:$0xff]
      %v1473 = vld [vmem:[#allocation5 + $0x8] sm:$0xff]
      %v1474 = vld [vmem:[#allocation5 + $0x10] sm:$0xff]
      %v1475 = vld [vmem:[#allocation5 + $0x18] sm:$0xff]
      %v1476 = vld [vmem:[#allocation4] sm:$0xff]
      %v1477 = vld [vmem:[#allocation4 + $0x8] sm:$0xff]
      %v1478 = vld [vmem:[#allocation4 + $0x10] sm:$0xff]
      %v1479 = vld [vmem:[#allocation4 + $0x18] sm:$0xff]
      %1481 = vset.pattern.permute.xlu0 0
      %1482 = vperm.xlu0 %1481, %v1476
      %v1483 = vpop.permute.xlu0 %1482
      %1486 = vset.pattern.permute.xlu0 0
      %1487 = vperm.xlu0 %1486, %v1477
      %v1488 = vpop.permute.xlu0 %1487
      %1491 = vset.pattern.permute.xlu0 0
      %1492 = vperm.xlu0 %1491, %v1478
      %v1493 = vpop.permute.xlu0 %1492
      %1496 = vset.pattern.permute.xlu0 0
      %1497 = vperm.xlu0 %1496, %v1479
      %v1498 = vpop.permute.xlu0 %1497
      %v1500 = vrcp.pop %v1483
      %v1501 = vmul.f32 %v1472, %v1500
      %v1502 = vrcp.pop %v1488
      %v1503 = vmul.f32 %v1473, %v1502
      %v1504 = vrcp.pop %v1493
      %v1505 = vmul.f32 %v1474, %v1504
      %v1506 = vrcp.pop %v1498
      %v1507 = vmul.f32 %v1475, %v1506
      %1508 = vst.msk [vmem:[#allocation15] sm:$0xff] %vm459, %v1501
      %1509 = vst.msk [vmem:[#allocation15 + $0x8] sm:$0xff] %vm459, %v1503
      %1510 = vst.msk [vmem:[#allocation15 + $0x10] sm:$0xff] %vm459, %v1505
      %1511 = vst.msk [vmem:[#allocation15 + $0x18] sm:$0xff] %vm459, %v1507
    $region49: #{tpu_custom_call.1} parent=1 // pred_fallthru
      _
    // Predicated region
    $region50: #{tpu_custom_call.1} parent=1 // pred_check
      _
    $region51: #{tpu_custom_call.1} parent=1 // pred_check_branch
      %1513 = sbr.rel (0) target = $region53
    $region52: #{tpu_custom_call.1} parent=1 // pred_region
      %s1515 = ssub.s32 512, 512
      %1516 = vsyncadd [#allocation8], %s1515
      %s1517 = sshll.u32 [#allocation15], 4
      %s1518 = int_to_ptr.vmem [resolvable:$true] %s1517
      %1523 = dma.vmem_to_hbm [thread:$0]  %s1518, 512, %s5, [#allocation8], 128, 128, 8
    $region53: #{tpu_custom_call.1} parent=1 // pred_fallthru
      _
    // Predicated region
    $region54: #{tpu_custom_call.1} parent=1 // pred_check
      _
    $region55: #{tpu_custom_call.1} parent=1 // pred_check_branch
      %1525 = sbr.rel (0) target = $region57
    $region56: #{tpu_custom_call.1} parent=1 // pred_region
      %1526 = dma.done [#allocation8], 512
    $region57: #{tpu_custom_call.1} parent=1 // pred_fallthru
      _
    %1527 = vsyncpa [#allocation7], 1
    %1528 = vsyncpa [#allocation10], 1
    %1529 = vsyncpa [#allocation13], 1
    %1530 = vsyncpa [#allocation8], 1

</llo_original>
